<compile_context>
chip_gen: v6e
topology: v6e:2x2x1
jax: 0.10.0
libtpu: 0.0.40
codegen_flags: <defaults>
</compile_context>

<pallas_src>
import functools

import jax
import jax.numpy as jnp
from jax.experimental import pallas as pl
from jax.experimental.pallas import tpu as pltpu


def _ffn_kernel(x_ref, w1_ref, w3_ref, w2_ref, o_ref, acc_ref):
    # x_ref:   (tm, D)  bf16   (resident across the H grid axis)
    # w1_ref:  (D, th)  bf16   gate projection H-tile
    # w3_ref:  (D, th)  bf16   up   projection H-tile
    # w2_ref:  (th, D)  bf16   down projection H-tile
    # o_ref:   (tm, D)  output dtype
    # acc_ref: (tm, D)  f32 accumulator scratch
    h_step = pl.program_id(1)

    @pl.when(h_step == 0)
    def _init():
        acc_ref[...] = jnp.zeros_like(acc_ref)

    x = x_ref[...]
    # Gate / up projections: MXU matmuls with f32 accumulation.
    g = jnp.dot(x, w1_ref[...], preferred_element_type=jnp.float32)
    u = jnp.dot(x, w3_ref[...], preferred_element_type=jnp.float32)
    # SiLU in f32 (sigmoid goes to the EUP slot), then bf16 for the down matmul.
    hh = (g * jax.nn.sigmoid(g) * u).astype(w2_ref.dtype)
    # Partial down projection for this H-tile, accumulated in f32.
    acc_ref[...] += jnp.dot(hh, w2_ref[...], preferred_element_type=jnp.float32)

    @pl.when(h_step == pl.num_programs(1) - 1)
    def _finalize():
        o_ref[...] = acc_ref[...].astype(o_ref.dtype)


def _round_up(v, m):
    return ((v + m - 1) // m) * m


@functools.partial(jax.jit, static_argnames=("block_tokens", "block_hidden"))
def feed_forward(x, w1, w3, w2, *, block_tokens=256, block_hidden=256):
    """x: (B, S, D); w1, w3: (D, H); w2: (H, D)  (weights pre-transposed vs nn.Linear)."""
    B, S, D = x.shape
    H = w1.shape[1]
    assert w1.shape == (D, H) and w3.shape == (D, H) and w2.shape == (H, D)
    assert H % 128 == 0, "hidden dim must be a multiple of 128"
    assert block_hidden % 128 == 0, "block_hidden must be a multiple of 128"

    out_dtype = x.dtype
    cdt = jnp.bfloat16

    T = B * S
    # Token tile: big for MXU M-utilization, but no bigger than the padded problem.
    tm = min(block_tokens, _round_up(T, 128))
    T_pad = _round_up(T, tm)
    # Hidden (reduction) tile: largest multiple of 128 <= block_hidden dividing H.
    th = min(block_hidden, H)
    while H % th != 0:
        th -= 128
    n_t = T_pad // tm
    n_h = H // th

    x2d = x.reshape(T, D).astype(cdt)
    if T_pad != T:
        x2d = jnp.pad(x2d, ((0, T_pad - T), (0, 0)))
    w1c = w1.astype(cdt)
    w3c = w3.astype(cdt)
    w2c = w2.astype(cdt)

    itemsize = jnp.dtype(cdt).itemsize
    cost = pl.CostEstimate(
        flops=6 * T_pad * D * H,                       # gate + up + down projections
        transcendentals=T_pad * H,                     # sigmoid
        bytes_accessed=(
            T_pad * D * itemsize                                   # x read
            + T_pad * D * jnp.dtype(out_dtype).itemsize            # out write
            + (w1c.size + w3c.size + w2c.size) * itemsize * n_t    # weights per token tile
        ),
    )

    out2d = pl.pallas_call(
        _ffn_kernel,
        out_shape=jax.ShapeDtypeStruct((T_pad, D), out_dtype),
        grid_spec=pltpu.PrefetchScalarGridSpec(
            num_scalar_prefetch=0,
            grid=(n_t, n_h),                                        # reduction axis last
            in_specs=[
                pl.BlockSpec((tm, D), lambda i, h: (i, 0)),         # x tile (resident over H)
                pl.BlockSpec((D, th), lambda i, h: (0, h)),         # W1 H-tile
                pl.BlockSpec((D, th), lambda i, h: (0, h)),         # W3 H-tile
                pl.BlockSpec((th, D), lambda i, h: (h, 0)),         # W2 H-tile
            ],
            out_specs=pl.BlockSpec((tm, D), lambda i, h: (i, 0)),   # accumulator output
            scratch_shapes=[pltpu.VMEM((tm, D), jnp.float32)],
        ),
        compiler_params=pltpu.CompilerParams(
            dimension_semantics=("parallel", "arbitrary"),
            vmem_limit_bytes=64 * 1024 * 1024,
        ),
        cost_estimate=cost,
    )(x2d, w1c, w3c, w2c)

    return out2d[:T].reshape(B, S, D)


def _reference(x, w1, w3, w2):
    # Mirror the kernel's bf16 operand precision so the comparison stays tight.
    f32 = jnp.float32
    xf = x.astype(jnp.bfloat16).astype(f32)
    w1f = w1.astype(jnp.bfloat16).astype(f32)
    w3f = w3.astype(jnp.bfloat16).astype(f32)
    w2f = w2.astype(jnp.bfloat16).astype(f32)
    h1 = xf @ w1f
    h3 = xf @ w3f
    swish = h1 * jax.nn.sigmoid(h1)
    h = (swish * h3).astype(jnp.bfloat16).astype(f32)
    return h @ w2f


if __name__ == "__main__":
    # Small config consistent with the module's __init__ formula:
    #   hidden = multiple_of * ceil((2 * 4 * dim / 3) / multiple_of)
    dim = 128
    multiple_of = 256
    hidden = 4 * dim
    hidden = int(2 * hidden / 3)
    hidden = multiple_of * ((hidden + multiple_of - 1) // multiple_of)  # -> 512

    batch, seq = 2, 8

    key = jax.random.PRNGKey(0)
    kx, k1, k2, k3 = jax.random.split(key, 4)
    x = jax.random.normal(kx, (batch, seq, dim), dtype=jnp.float32)
    # Deterministic "Linear" weights (no bias). Stored pre-transposed: (in, out).
    w1 = jax.random.normal(k1, (dim, hidden), dtype=jnp.float32) * (1.0 / dim**0.5)
    w3 = jax.random.normal(k3, (dim, hidden), dtype=jnp.float32) * (1.0 / dim**0.5)
    w2 = jax.random.normal(k2, (hidden, dim), dtype=jnp.float32) * (1.0 / hidden**0.5)

    # block_hidden=256 -> two H steps at this size, exercising the accumulator path.
    out = feed_forward(x, w1, w3, w2, block_tokens=256, block_hidden=256)
    jax.block_until_ready(out)

    ref = _reference(x, w1, w3, w2)
    assert out.shape == (batch, seq, dim)
    assert jnp.allclose(out, ref, atol=3e-2, rtol=3e-2), (
        f"mismatch vs reference: max abs err {jnp.max(jnp.abs(out - ref))}"
    )

    print("KERNEL_OK")
</pallas_src>

<mosaic_0001>
module attributes {stable_mosaic.version = 11 : i64} {
  func.func @_ffn_kernel(%arg0: i32, %arg1: i32, %arg2: memref<128x128xbf16, #tpu.memory_space<vmem>>, %arg3: memref<128x256xbf16, #tpu.memory_space<vmem>>, %arg4: memref<128x256xbf16, #tpu.memory_space<vmem>>, %arg5: memref<256x128xbf16, #tpu.memory_space<vmem>>, %arg6: memref<128x128xf32, #tpu.memory_space<vmem>>, %arg7: memref<128x128xf32, #tpu.memory_space<vmem>>) attributes {dimension_semantics = [#tpu.dimension_semantics<parallel>, #tpu.dimension_semantics<arbitrary>], iteration_bounds = array<i64: 1, 2>, scalar_prefetch = 0 : i64, scratch_operands = 1 : i64, tpu.core_type = #tpu.core_type<tc>, window_params = [{transform_indices = @transform_0, window_bounds = array<i64: 128, 128>}, {transform_indices = @transform_1, window_bounds = array<i64: 128, 256>}, {transform_indices = @transform_2, window_bounds = array<i64: 128, 256>}, {transform_indices = @transform_3, window_bounds = array<i64: 256, 128>}, {transform_indices = @transform_4, window_bounds = array<i64: 128, 128>}]} {
    %c0_i32 = arith.constant 0 : i32
    %0 = arith.cmpi eq, %arg1, %c0_i32 : i32
    %1 = arith.extui %0 : i1 to i32
    %c0_i32_0 = arith.constant 0 : i32
    %2 = arith.cmpi ne, %1, %c0_i32_0 : i32
    scf.if %2 {
      %cst_16 = arith.constant 0.000000e+00 : f32
      %24 = vector.broadcast %cst_16 : f32 to vector<128x128xf32>
      %c0_17 = arith.constant 0 : index
      %c0_18 = arith.constant 0 : index
      %25 = vector.load %arg7[%c0_17, %c0_18] : memref<128x128xf32, #tpu.memory_space<vmem>>, vector<128x128xf32>
      tpu.vector_store %arg7[%c0_17, %c0_18], %24 {strides = array<i32>} : memref<128x128xf32, #tpu.memory_space<vmem>>, vector<128x128xf32>,
    } else {
    }
    %c0 = arith.constant 0 : index
    %c0_1 = arith.constant 0 : index
    %3 = vector.load %arg2[%c0, %c0_1] : memref<128x128xbf16, #tpu.memory_space<vmem>>, vector<128x128xbf16>
    %c0_2 = arith.constant 0 : index
    %c0_3 = arith.constant 0 : index
    %4 = vector.load %arg3[%c0_2, %c0_3] : memref<128x256xbf16, #tpu.memory_space<vmem>>, vector<128x256xbf16>
    %cst = arith.constant dense<0.000000e+00> : vector<128x256xf32>
    %5 = tpu.matmul %3, %4, %cst {dimension_numbers = #tpu.dot_dimension_numbers<[1], [0], [0], [1], [0, 0, 1, 1], [], []>} : vector<128x128xbf16>, vector<128x256xbf16>, vector<128x256xf32> -> vector<128x256xf32>
    %c0_4 = arith.constant 0 : index
    %c0_5 = arith.constant 0 : index
    %6 = vector.load %arg4[%c0_4, %c0_5] : memref<128x256xbf16, #tpu.memory_space<vmem>>, vector<128x256xbf16>
    %cst_6 = arith.constant dense<0.000000e+00> : vector<128x256xf32>
    %7 = tpu.matmul %3, %6, %cst_6 {dimension_numbers = #tpu.dot_dimension_numbers<[1], [0], [0], [1], [0, 0, 1, 1], [], []>} : vector<128x128xbf16>, vector<128x256xbf16>, vector<128x256xf32> -> vector<128x256xf32>
    %8 = arith.negf %5 : vector<128x256xf32>
    %9 = math.exp %8 : vector<128x256xf32>
    %cst_7 = arith.constant 1.000000e+00 : f32
    %10 = vector.broadcast %cst_7 : f32 to vector<128x256xf32>
    %11 = arith.addf %10, %9 : vector<128x256xf32>
    %12 = arith.divf %10, %11 : vector<128x256xf32>
    %13 = arith.mulf %5, %12 : vector<128x256xf32>
    %14 = arith.mulf %13, %7 : vector<128x256xf32>
    %15 = arith.truncf %14 : vector<128x256xf32> to vector<128x256xbf16>
    %c0_8 = arith.constant 0 : index
    %c0_9 = arith.constant 0 : index
    %16 = vector.load %arg7[%c0_8, %c0_9] : memref<128x128xf32, #tpu.memory_space<vmem>>, vector<128x128xf32>
    %c0_10 = arith.constant 0 : index
    %c0_11 = arith.constant 0 : index
    %17 = vector.load %arg5[%c0_10, %c0_11] : memref<256x128xbf16, #tpu.memory_space<vmem>>, vector<256x128xbf16>
    %cst_12 = arith.constant dense<0.000000e+00> : vector<128x128xf32>
    %18 = tpu.matmul %15, %17, %cst_12 {dimension_numbers = #tpu.dot_dimension_numbers<[1], [0], [0], [1], [0, 0, 1, 1], [], []>} : vector<128x256xbf16>, vector<256x128xbf16>, vector<128x128xf32> -> vector<128x128xf32>
    %19 = arith.addf %16, %18 : vector<128x128xf32>
    %c0_13 = arith.constant 0 : index
    %c0_14 = arith.constant 0 : index
    %20 = vector.load %arg7[%c0_13, %c0_14] : memref<128x128xf32, #tpu.memory_space<vmem>>, vector<128x128xf32>
    tpu.vector_store %arg7[%c0_13, %c0_14], %19 {strides = array<i32>} : memref<128x128xf32, #tpu.memory_space<vmem>>, vector<128x128xf32>,
    %c1_i32 = arith.constant 1 : i32
    %21 = arith.cmpi eq, %arg1, %c1_i32 : i32
    %22 = arith.extui %21 : i1 to i32
    %c0_i32_15 = arith.constant 0 : i32
    %23 = arith.cmpi ne, %22, %c0_i32_15 : i32
    scf.if %23 {
      %c0_16 = arith.constant 0 : index
      %c0_17 = arith.constant 0 : index
      %24 = vector.load %arg7[%c0_16, %c0_17] : memref<128x128xf32, #tpu.memory_space<vmem>>, vector<128x128xf32>
      %c0_18 = arith.constant 0 : index
      %c0_19 = arith.constant 0 : index
      %25 = vector.load %arg6[%c0_18, %c0_19] : memref<128x128xf32, #tpu.memory_space<vmem>>, vector<128x128xf32>
      tpu.vector_store %arg6[%c0_18, %c0_19], %24 {strides = array<i32>} : memref<128x128xf32, #tpu.memory_space<vmem>>, vector<128x128xf32>,
    } else {
    }
    return
  }
  func.func @transform_0(%arg0: i32, %arg1: i32) -> (i32, i32) {
    %c0_i32 = arith.constant 0 : i32
    %c0_i32_0 = arith.constant 0 : i32
    return %arg0, %c0_i32 : i32, i32
  }
  func.func @transform_1(%arg0: i32, %arg1: i32) -> (i32, i32) {
    %c0_i32 = arith.constant 0 : i32
    %c0_i32_0 = arith.constant 0 : i32
    return %c0_i32, %arg1 : i32, i32
  }
  func.func @transform_2(%arg0: i32, %arg1: i32) -> (i32, i32) {
    %c0_i32 = arith.constant 0 : i32
    %c0_i32_0 = arith.constant 0 : i32
    return %c0_i32, %arg1 : i32, i32
  }
  func.func @transform_3(%arg0: i32, %arg1: i32) -> (i32, i32) {
    %c0_i32 = arith.constant 0 : i32
    %c0_i32_0 = arith.constant 0 : i32
    return %arg1, %c0_i32 : i32, i32
  }
  func.func @transform_4(%arg0: i32, %arg1: i32) -> (i32, i32) {
    %c0_i32 = arith.constant 0 : i32
    %c0_i32_0 = arith.constant 0 : i32
    return %arg0, %c0_i32 : i32, i32
  }
}

</mosaic_0001>

<llo_original>
// kernel: feed_forward.1
$region0: #{feed_forward.1}
  #allocation0 [shape = 'u32[]', space=smem, size = 0x4, offset = 0x4, fixed_abs, tag = 'smem constant byte address 0x4 - core index']
  #allocation1 [shape = 'u32[144,128]{1,0:T(1,128)}', space=vmem, size = 0x12000, scoped, tag = 'internal scratch']
  #allocation2 [shape = 'f32[128,128]{1,0:T(8,128)}', space=vmem, size = 0x10000, scoped, tag = 'scratch operand']
  %s0 = inlined_call_operand.vmem [shape: bf16[128,128], index: 0, kind: input, shape index: {}]
  %s1 = inlined_call_operand.vmem [shape: bf16[128,512], index: 1, kind: input, shape index: {}]
  %s2 = inlined_call_operand.vmem [shape: bf16[128,512], index: 2, kind: input, shape index: {}]
  %s3 = inlined_call_operand.vmem [shape: bf16[512,128], index: 3, kind: input, shape index: {}]
  %s4 = inlined_call_operand.vmem [shape: f32[128,128], index: 4, kind: output, shape index: {}]
  %s5 = sld [smem:[#allocation0]]
  $region133: #{feed_forward.1} parent=0
    _
  %s7 = ssub.s32 1, %s5
  %s8 = scalar_select 0, %s7, %s5
  $region1: #{feed_forward.1} parent=0
    #allocation3 [shape = 'u8[131072]{0}', space=vmem, size = 0x20000, scoped, tag = 'input window, operand 1']
    #allocation4 [shape = 'u8[131072]{0}', space=vmem, size = 0x20000, scoped, tag = 'input window, operand 2']
    loop: start=0, step=1, limit=4
    $region2: #{feed_forward.1} parent=1 // loop_pre_header
      _
    $region3: #{feed_forward.1} parent=1 // loop_header
      %s10 = sphi 0, %s14
      %p11 = scmp.ge.s32.totalorder %s10, 4
      %s17 = sphi 0, %s29
      %s18 = sphi 0, %s25
      %s19 = sphi 0, %s17
      %s20 = sphi 0, %s18
      %s21 = sphi 0, %s19
      %s22 = sphi 0, %s20
      %s32 = sphi 0, %s34
      %s35 = sphi 0, %s32
      %s36 = sphi 0, %s35
      %s52 = sphi 0, %s36
      %s58 = sphi 0, %s60
      %s61 = sphi 0, %s58
      %s62 = sphi 0, %s61
      %s78 = sphi 0, %s62
      %s84 = sphi 0, %s86
      %s87 = sphi 0, %s84
      %s88 = sphi 0, %s87
      %s104 = sphi 0, %s88
      %s110 = sphi 0, %s112
      %s113 = sphi 0, %s110
      %s114 = sphi 0, %s113
      %s130 = sphi 0, %s114
      %s136 = sphi 0, %s138
      %s139 = sphi 0, %s136
      %s140 = sphi 0, %s139
      %s156 = sphi 0, %s140
    $region4: #{feed_forward.1} parent=1 // loop_header_branch
      %13 = sbr.rel (%p11) target = $region8
    $region5: #{feed_forward.1} parent=1 // loop_body
      %s15 = ssub.s32 %s10, 1
      %s16 = ssub.s32 %s10, 2
      %s23 = sadd.s32 1, %s18
      %p24 = scmp.ge.s32.totalorder %s23, 2
      %s25 = scalar_select %p24, 0, %s23
      %s26 = sadd.s32 1, %s17
      %s27 = scalar_select %p24, %s26, %s17
      %p28 = scmp.ge.s32.totalorder %s27, 1
      %s29 = scalar_select %p28, 0, %s27
      %s30 = ssub.s32 %s17, %s29
      %p31 = scmp.eq.s32.totalorder %s30, 0
      %s33 = sadd.s32 %s32, 1
      %s34 = scalar_select %p31, %s32, %s33
      %p37 = pneg %p31
      %p38 = scmp.eq.s32.totalorder %s10, 1
      %p39 = por %p37, %p38
      %p40 = scmp.ne.s32.totalorder %s32, %s35
      %p41 = scmp.eq.s32.totalorder %s10, 0
      %p42 = por %p40, %p41
      %p43 = scmp.ne.s32.totalorder %s32, %s35
      %p44 = scmp.eq.s32.totalorder %s15, 1
      %p45 = por %p43, %p44
      %p46 = scmp.ne.s32.totalorder %s35, %s36
      %p47 = scmp.eq.s32.totalorder %s15, 0
      %p48 = por %p46, %p47
      %p49 = scmp.ne.s32.totalorder %s35, %s36
      %p50 = scmp.eq.s32.totalorder %s16, 1
      %p51 = por %p49, %p50
      %p53 = scmp.ne.s32.totalorder %s36, %s52
      %p54 = scmp.eq.s32.totalorder %s16, 0
      %p55 = por %p53, %p54
      %s56 = ssub.s32 %s18, %s25
      %p57 = scmp.eq.s32.totalorder %s56, 0
      %s59 = sadd.s32 %s58, 1
      %s60 = scalar_select %p57, %s58, %s59
      %p63 = pneg %p57
      %p64 = scmp.eq.s32.totalorder %s10, 1
      %p65 = por %p63, %p64
      %p66 = scmp.ne.s32.totalorder %s58, %s61
      %p67 = scmp.eq.s32.totalorder %s10, 0
      %p68 = por %p66, %p67
      %p69 = scmp.ne.s32.totalorder %s58, %s61
      %p70 = scmp.eq.s32.totalorder %s15, 1
      %p71 = por %p69, %p70
      %p72 = scmp.ne.s32.totalorder %s61, %s62
      %p73 = scmp.eq.s32.totalorder %s15, 0
      %p74 = por %p72, %p73
      %p75 = scmp.ne.s32.totalorder %s61, %s62
      %p76 = scmp.eq.s32.totalorder %s16, 1
      %p77 = por %p75, %p76
      %p79 = scmp.ne.s32.totalorder %s62, %s78
      %p80 = scmp.eq.s32.totalorder %s16, 0
      %p81 = por %p79, %p80
      %s82 = ssub.s32 %s18, %s25
      %p83 = scmp.eq.s32.totalorder %s82, 0
      %s85 = sadd.s32 %s84, 1
      %s86 = scalar_select %p83, %s84, %s85
      %p89 = pneg %p83
      %p90 = scmp.eq.s32.totalorder %s10, 1
      %p91 = por %p89, %p90
      %p92 = scmp.ne.s32.totalorder %s84, %s87
      %p93 = scmp.eq.s32.totalorder %s10, 0
      %p94 = por %p92, %p93
      %p95 = scmp.ne.s32.totalorder %s84, %s87
      %p96 = scmp.eq.s32.totalorder %s15, 1
      %p97 = por %p95, %p96
      %p98 = scmp.ne.s32.totalorder %s87, %s88
      %p99 = scmp.eq.s32.totalorder %s15, 0
      %p100 = por %p98, %p99
      %p101 = scmp.ne.s32.totalorder %s87, %s88
      %p102 = scmp.eq.s32.totalorder %s16, 1
      %p103 = por %p101, %p102
      %p105 = scmp.ne.s32.totalorder %s88, %s104
      %p106 = scmp.eq.s32.totalorder %s16, 0
      %p107 = por %p105, %p106
      %s108 = ssub.s32 %s18, %s25
      %p109 = scmp.eq.s32.totalorder %s108, 0
      %s111 = sadd.s32 %s110, 1
      %s112 = scalar_select %p109, %s110, %s111
      %p115 = pneg %p109
      %p116 = scmp.eq.s32.totalorder %s10, 1
      %p117 = por %p115, %p116
      %p118 = scmp.ne.s32.totalorder %s110, %s113
      %p119 = scmp.eq.s32.totalorder %s10, 0
      %p120 = por %p118, %p119
      %p121 = scmp.ne.s32.totalorder %s110, %s113
      %p122 = scmp.eq.s32.totalorder %s15, 1
      %p123 = por %p121, %p122
      %p124 = scmp.ne.s32.totalorder %s113, %s114
      %p125 = scmp.eq.s32.totalorder %s15, 0
      %p126 = por %p124, %p125
      %p127 = scmp.ne.s32.totalorder %s113, %s114
      %p128 = scmp.eq.s32.totalorder %s16, 1
      %p129 = por %p127, %p128
      %p131 = scmp.ne.s32.totalorder %s114, %s130
      %p132 = scmp.eq.s32.totalorder %s16, 0
      %p133 = por %p131, %p132
      %s134 = ssub.s32 %s17, %s29
      %p135 = scmp.eq.s32.totalorder %s134, 0
      %s137 = sadd.s32 %s136, 1
      %s138 = scalar_select %p135, %s136, %s137
      %p141 = pneg %p135
      %p142 = scmp.eq.s32.totalorder %s10, 1
      %p143 = por %p141, %p142
      %p144 = scmp.ne.s32.totalorder %s136, %s139
      %p145 = scmp.eq.s32.totalorder %s10, 0
      %p146 = por %p144, %p145
      %p147 = scmp.ne.s32.totalorder %s136, %s139
      %p148 = scmp.eq.s32.totalorder %s15, 1
      %p149 = por %p147, %p148
      %p150 = scmp.ne.s32.totalorder %s139, %s140
      %p151 = scmp.eq.s32.totalorder %s15, 0
      %p152 = por %p150, %p151
      %p153 = scmp.ne.s32.totalorder %s139, %s140
      %p154 = scmp.eq.s32.totalorder %s16, 1
      %p155 = por %p153, %p154
      %p157 = scmp.ne.s32.totalorder %s140, %s156
      %p158 = scmp.eq.s32.totalorder %s16, 0
      %p159 = por %p157, %p158
      %p160 = scmp.le.s32.totalorder 1, %s10
      %p161 = scmp.lt.s32.totalorder %s10, 3
      %p162 = pnand %p160, %p161
      %p163 = pneg %p162
      // Predicated region
      $region9: #{feed_forward.1} parent=5 // pred_check
        _
      $region10: #{feed_forward.1} parent=5 // pred_check_branch
        %165 = sbr.rel (%p162) target = $region12
      $region11: #{feed_forward.1} parent=5 // pred_region
        %s166 = ssub.s32 %s10, 1
        // Predicated region
        $region13: #{feed_forward.1} parent=11 // pred_check
          %p167 = pneg %p48
        $region14: #{feed_forward.1} parent=11 // pred_check_branch
          %169 = sbr.rel (%p167) target = $region16
        $region15: #{feed_forward.1} parent=11 // pred_region
          %s170 = smul.u32 16, %s19
          %p171 = scmp.lt.s32.totalorder %s170, 15
          %s172 = scalar_select %p171, %s170, 15
          %s173 = smul.addr %s172, 4
          %s174 = scalar_lea.vmem %s0, %s173
          %s175 = smul.u32 16, %s19
        $region16: #{feed_forward.1} parent=11 // pred_fallthru
          _
      $region12: #{feed_forward.1} parent=5 // pred_fallthru
        _
      %p176 = scmp.lt.s32.totalorder %s10, 2
      // Predicated region
      $region17: #{feed_forward.1} parent=5 // pred_check
        %p177 = pneg %p176
      $region18: #{feed_forward.1} parent=5 // pred_check_branch
        %179 = sbr.rel (%p177) target = $region20
      $region19: #{feed_forward.1} parent=5 // pred_region
        // Predicated region
        $region21: #{feed_forward.1} parent=19 // pred_check
          %p180 = pneg %p68
        $region22: #{feed_forward.1} parent=19 // pred_check_branch
          %182 = sbr.rel (%p180) target = $region24
        $region23: #{feed_forward.1} parent=19 // pred_region
          %s183 = sand.u32 %s58, 1
          %s184 = sand.u32 %s58, 1
          %s185 = smul.addr %s184, 128
          %s186 = scalar_lea.vmem [#allocation3], %s185
          %s187 = smul.u32 2, %s18
          %s188 = smul.addr %s187, 4
          %s189 = scalar_lea.vmem %s1, %s188
          // Predicated region
          $region25: #{feed_forward.1} parent=23 // pred_check
            _
          $region26: #{feed_forward.1} parent=23 // pred_check_branch
            %191 = sbr.rel (0) target = $region28
          $region27: #{feed_forward.1} parent=23 // pred_region
            // Predicated region
            $region29: #{feed_forward.1} parent=27 // pred_check
              _
            $region30: #{feed_forward.1} parent=27 // pred_check_branch
              %193 = sbr.rel (0) target = $region32
            $region31: #{feed_forward.1} parent=27 // pred_region
              // Predicated region
              $region44: #{feed_forward.1} parent=31 // pred_check
                _
              $region45: #{feed_forward.1} parent=31 // pred_check_branch
                %239 = sbr.rel (0) target = $region47
              $region46: #{feed_forward.1} parent=31 // pred_region
                loop: start=0, step=1, limit=1
                $region48: #{feed_forward.1} parent=46 // loop_pre_header
                  _
                $region49: #{feed_forward.1} parent=46 // loop_header
                  %s241 = sphi 0, %s245
                  %p242 = scmp.ge.s32.totalorder %s241, 1
                  %s246 = sphi %s189, %s189
                  %s247 = sphi %s186, %s186
                $region50: #{feed_forward.1} parent=46 // loop_header_branch
                  %244 = sbr.rel (%p242) target = $region54
                $region51: #{feed_forward.1} parent=46 // loop_body
                  %v248 = vld [vmem:[%s246] sm:$0xff]
                  %249 = vst [vmem:[%s247] sm:$0xff] %v248
                  %v250 = vld [vmem:[%s246 + $0x10] sm:$0xff]
                  %251 = vst [vmem:[%s247 + $0x8] sm:$0xff] %v250
                  %v252 = vld [vmem:[%s246 + $0x20] sm:$0xff]
                  %253 = vst [vmem:[%s247 + $0x10] sm:$0xff] %v252
                  %v254 = vld [vmem:[%s246 + $0x30] sm:$0xff]
                  %255 = vst [vmem:[%s247 + $0x18] sm:$0xff] %v254
                  %v256 = vld [vmem:[%s246 + $0x40] sm:$0xff]
                  %257 = vst [vmem:[%s247 + $0x20] sm:$0xff] %v256
                  %v258 = vld [vmem:[%s246 + $0x50] sm:$0xff]
                  %259 = vst [vmem:[%s247 + $0x28] sm:$0xff] %v258
                  %v260 = vld [vmem:[%s246 + $0x60] sm:$0xff]
                  %261 = vst [vmem:[%s247 + $0x30] sm:$0xff] %v260
                  %v262 = vld [vmem:[%s246 + $0x70] sm:$0xff]
                  %263 = vst [vmem:[%s247 + $0x38] sm:$0xff] %v262
                  %v264 = vld [vmem:[%s246 + $0x80] sm:$0xff]
                  %265 = vst [vmem:[%s247 + $0x40] sm:$0xff] %v264
                  %v266 = vld [vmem:[%s246 + $0x90] sm:$0xff]
                  %267 = vst [vmem:[%s247 + $0x48] sm:$0xff] %v266
                  %v268 = vld [vmem:[%s246 + $0xa0] sm:$0xff]
                  %269 = vst [vmem:[%s247 + $0x50] sm:$0xff] %v268
                  %v270 = vld [vmem:[%s246 + $0xb0] sm:$0xff]
                  %271 = vst [vmem:[%s247 + $0x58] sm:$0xff] %v270
                  %v272 = vld [vmem:[%s246 + $0xc0] sm:$0xff]
                  %273 = vst [vmem:[%s247 + $0x60] sm:$0xff] %v272
                  %v274 = vld [vmem:[%s246 + $0xd0] sm:$0xff]
                  %275 = vst [vmem:[%s247 + $0x68] sm:$0xff] %v274
                  %v276 = vld [vmem:[%s246 + $0xe0] sm:$0xff]
                  %277 = vst [vmem:[%s247 + $0x70] sm:$0xff] %v276
                  %v278 = vld [vmem:[%s246 + $0xf0] sm:$0xff]
                  %279 = vst [vmem:[%s247 + $0x78] sm:$0xff] %v278
                $region52: #{feed_forward.1} parent=46 // loop_footer
                  %s245 = sadd.s32 1, %s241
                $region53: #{feed_forward.1} parent=46 // loop_footer_branch
                  %240 = sbr.rel target = $region49
                $region54: #{feed_forward.1} parent=46 // loop_exit
                  _
              $region47: #{feed_forward.1} parent=31 // pred_fallthru
                _
              // Predicated region
              $region55: #{feed_forward.1} parent=31 // pred_check
                _
              $region56: #{feed_forward.1} parent=31 // pred_check_branch
                %281 = sbr.rel target = $region58
              $region57: #{feed_forward.1} parent=31 // pred_region
                _
              $region58: #{feed_forward.1} parent=31 // pred_fallthru
                _
            $region32: #{feed_forward.1} parent=27 // pred_fallthru
              _
            // Predicated region
            $region33: #{feed_forward.1} parent=27 // pred_check
              _
            $region34: #{feed_forward.1} parent=27 // pred_check_branch
              %195 = sbr.rel target = $region36
            $region35: #{feed_forward.1} parent=27 // pred_region
              %s197 = ssub.s32 256, 1
              loop: start=0, step=1, limit=1
              $region37: #{feed_forward.1} parent=35 // loop_pre_header
                _
              $region38: #{feed_forward.1} parent=35 // loop_header
                %s199 = sphi 0, %s203
                %p200 = scmp.ge.s32.totalorder %s199, 1
                %s204 = sphi %s189, %s189
                %s205 = sphi %s186, %s186
              $region39: #{feed_forward.1} parent=35 // loop_header_branch
                %202 = sbr.rel (%p200) target = $region43
              $region40: #{feed_forward.1} parent=35 // loop_body
                %v206 = vld [vmem:[%s204] sm:%s197]
                %207 = vst [vmem:[%s205] sm:%s197] %v206
                %v208 = vld [vmem:[%s204 + $0x10] sm:%s197]
                %209 = vst [vmem:[%s205 + $0x8] sm:%s197] %v208
                %v210 = vld [vmem:[%s204 + $0x20] sm:%s197]
                %211 = vst [vmem:[%s205 + $0x10] sm:%s197] %v210
                %v212 = vld [vmem:[%s204 + $0x30] sm:%s197]
                %213 = vst [vmem:[%s205 + $0x18] sm:%s197] %v212
                %v214 = vld [vmem:[%s204 + $0x40] sm:%s197]
                %215 = vst [vmem:[%s205 + $0x20] sm:%s197] %v214
                %v216 = vld [vmem:[%s204 + $0x50] sm:%s197]
                %217 = vst [vmem:[%s205 + $0x28] sm:%s197] %v216
                %v218 = vld [vmem:[%s204 + $0x60] sm:%s197]
                %219 = vst [vmem:[%s205 + $0x30] sm:%s197] %v218
                %v220 = vld [vmem:[%s204 + $0x70] sm:%s197]
                %221 = vst [vmem:[%s205 + $0x38] sm:%s197] %v220
                %v222 = vld [vmem:[%s204 + $0x80] sm:%s197]
                %223 = vst [vmem:[%s205 + $0x40] sm:%s197] %v222
                %v224 = vld [vmem:[%s204 + $0x90] sm:%s197]
                %225 = vst [vmem:[%s205 + $0x48] sm:%s197] %v224
                %v226 = vld [vmem:[%s204 + $0xa0] sm:%s197]
                %227 = vst [vmem:[%s205 + $0x50] sm:%s197] %v226
                %v228 = vld [vmem:[%s204 + $0xb0] sm:%s197]
                %229 = vst [vmem:[%s205 + $0x58] sm:%s197] %v228
                %v230 = vld [vmem:[%s204 + $0xc0] sm:%s197]
                %231 = vst [vmem:[%s205 + $0x60] sm:%s197] %v230
                %v232 = vld [vmem:[%s204 + $0xd0] sm:%s197]
                %233 = vst [vmem:[%s205 + $0x68] sm:%s197] %v232
                %v234 = vld [vmem:[%s204 + $0xe0] sm:%s197]
                %235 = vst [vmem:[%s205 + $0x70] sm:%s197] %v234
                %v236 = vld [vmem:[%s204 + $0xf0] sm:%s197]
                %237 = vst [vmem:[%s205 + $0x78] sm:%s197] %v236
              $region41: #{feed_forward.1} parent=35 // loop_footer
                %s203 = sadd.s32 1, %s199
              $region42: #{feed_forward.1} parent=35 // loop_footer_branch
                %198 = sbr.rel target = $region38
              $region43: #{feed_forward.1} parent=35 // loop_exit
                _
            $region36: #{feed_forward.1} parent=27 // pred_fallthru
              _
          $region28: #{feed_forward.1} parent=23 // pred_fallthru
            _
          %282 = vnop
        $region24: #{feed_forward.1} parent=19 // pred_fallthru
          _
        // Predicated region
        $region59: #{feed_forward.1} parent=19 // pred_check
          %p283 = pneg %p94
        $region60: #{feed_forward.1} parent=19 // pred_check_branch
          %285 = sbr.rel (%p283) target = $region62
        $region61: #{feed_forward.1} parent=19 // pred_region
          %s286 = sand.u32 %s84, 1
          %s287 = sand.u32 %s84, 1
          %s288 = smul.addr %s287, 128
          %s289 = scalar_lea.vmem [#allocation4], %s288
          %s290 = smul.u32 2, %s18
          %s291 = smul.addr %s290, 4
          %s292 = scalar_lea.vmem %s2, %s291
          // Predicated region
          $region63: #{feed_forward.1} parent=61 // pred_check
            _
          $region64: #{feed_forward.1} parent=61 // pred_check_branch
            %294 = sbr.rel (0) target = $region66
          $region65: #{feed_forward.1} parent=61 // pred_region
            // Predicated region
            $region67: #{feed_forward.1} parent=65 // pred_check
              _
            $region68: #{feed_forward.1} parent=65 // pred_check_branch
              %296 = sbr.rel (0) target = $region70
            $region69: #{feed_forward.1} parent=65 // pred_region
              // Predicated region
              $region82: #{feed_forward.1} parent=69 // pred_check
                _
              $region83: #{feed_forward.1} parent=69 // pred_check_branch
                %342 = sbr.rel (0) target = $region85
              $region84: #{feed_forward.1} parent=69 // pred_region
                loop: start=0, step=1, limit=1
                $region86: #{feed_forward.1} parent=84 // loop_pre_header
                  _
                $region87: #{feed_forward.1} parent=84 // loop_header
                  %s344 = sphi 0, %s348
                  %p345 = scmp.ge.s32.totalorder %s344, 1
                  %s349 = sphi %s292, %s292
                  %s350 = sphi %s289, %s289
                $region88: #{feed_forward.1} parent=84 // loop_header_branch
                  %347 = sbr.rel (%p345) target = $region92
                $region89: #{feed_forward.1} parent=84 // loop_body
                  %v351 = vld [vmem:[%s349] sm:$0xff]
                  %352 = vst [vmem:[%s350] sm:$0xff] %v351
                  %v353 = vld [vmem:[%s349 + $0x10] sm:$0xff]
                  %354 = vst [vmem:[%s350 + $0x8] sm:$0xff] %v353
                  %v355 = vld [vmem:[%s349 + $0x20] sm:$0xff]
                  %356 = vst [vmem:[%s350 + $0x10] sm:$0xff] %v355
                  %v357 = vld [vmem:[%s349 + $0x30] sm:$0xff]
                  %358 = vst [vmem:[%s350 + $0x18] sm:$0xff] %v357
                  %v359 = vld [vmem:[%s349 + $0x40] sm:$0xff]
                  %360 = vst [vmem:[%s350 + $0x20] sm:$0xff] %v359
                  %v361 = vld [vmem:[%s349 + $0x50] sm:$0xff]
                  %362 = vst [vmem:[%s350 + $0x28] sm:$0xff] %v361
                  %v363 = vld [vmem:[%s349 + $0x60] sm:$0xff]
                  %364 = vst [vmem:[%s350 + $0x30] sm:$0xff] %v363
                  %v365 = vld [vmem:[%s349 + $0x70] sm:$0xff]
                  %366 = vst [vmem:[%s350 + $0x38] sm:$0xff] %v365
                  %v367 = vld [vmem:[%s349 + $0x80] sm:$0xff]
                  %368 = vst [vmem:[%s350 + $0x40] sm:$0xff] %v367
                  %v369 = vld [vmem:[%s349 + $0x90] sm:$0xff]
                  %370 = vst [vmem:[%s350 + $0x48] sm:$0xff] %v369
                  %v371 = vld [vmem:[%s349 + $0xa0] sm:$0xff]
                  %372 = vst [vmem:[%s350 + $0x50] sm:$0xff] %v371
                  %v373 = vld [vmem:[%s349 + $0xb0] sm:$0xff]
                  %374 = vst [vmem:[%s350 + $0x58] sm:$0xff] %v373
                  %v375 = vld [vmem:[%s349 + $0xc0] sm:$0xff]
                  %376 = vst [vmem:[%s350 + $0x60] sm:$0xff] %v375
                  %v377 = vld [vmem:[%s349 + $0xd0] sm:$0xff]
                  %378 = vst [vmem:[%s350 + $0x68] sm:$0xff] %v377
                  %v379 = vld [vmem:[%s349 + $0xe0] sm:$0xff]
                  %380 = vst [vmem:[%s350 + $0x70] sm:$0xff] %v379
                  %v381 = vld [vmem:[%s349 + $0xf0] sm:$0xff]
                  %382 = vst [vmem:[%s350 + $0x78] sm:$0xff] %v381
                $region90: #{feed_forward.1} parent=84 // loop_footer
                  %s348 = sadd.s32 1, %s344
                $region91: #{feed_forward.1} parent=84 // loop_footer_branch
                  %343 = sbr.rel target = $region87
                $region92: #{feed_forward.1} parent=84 // loop_exit
                  _
              $region85: #{feed_forward.1} parent=69 // pred_fallthru
                _
              // Predicated region
              $region93: #{feed_forward.1} parent=69 // pred_check
                _
              $region94: #{feed_forward.1} parent=69 // pred_check_branch
                %384 = sbr.rel target = $region96
              $region95: #{feed_forward.1} parent=69 // pred_region
                _
              $region96: #{feed_forward.1} parent=69 // pred_fallthru
                _
            $region70: #{feed_forward.1} parent=65 // pred_fallthru
              _
            // Predicated region
            $region71: #{feed_forward.1} parent=65 // pred_check
              _
            $region72: #{feed_forward.1} parent=65 // pred_check_branch
              %298 = sbr.rel target = $region74
            $region73: #{feed_forward.1} parent=65 // pred_region
              %s300 = ssub.s32 256, 1
              loop: start=0, step=1, limit=1
              $region75: #{feed_forward.1} parent=73 // loop_pre_header
                _
              $region76: #{feed_forward.1} parent=73 // loop_header
                %s302 = sphi 0, %s306
                %p303 = scmp.ge.s32.totalorder %s302, 1
                %s307 = sphi %s292, %s292
                %s308 = sphi %s289, %s289
              $region77: #{feed_forward.1} parent=73 // loop_header_branch
                %305 = sbr.rel (%p303) target = $region81
              $region78: #{feed_forward.1} parent=73 // loop_body
                %v309 = vld [vmem:[%s307] sm:%s300]
                %310 = vst [vmem:[%s308] sm:%s300] %v309
                %v311 = vld [vmem:[%s307 + $0x10] sm:%s300]
                %312 = vst [vmem:[%s308 + $0x8] sm:%s300] %v311
                %v313 = vld [vmem:[%s307 + $0x20] sm:%s300]
                %314 = vst [vmem:[%s308 + $0x10] sm:%s300] %v313
                %v315 = vld [vmem:[%s307 + $0x30] sm:%s300]
                %316 = vst [vmem:[%s308 + $0x18] sm:%s300] %v315
                %v317 = vld [vmem:[%s307 + $0x40] sm:%s300]
                %318 = vst [vmem:[%s308 + $0x20] sm:%s300] %v317
                %v319 = vld [vmem:[%s307 + $0x50] sm:%s300]
                %320 = vst [vmem:[%s308 + $0x28] sm:%s300] %v319
                %v321 = vld [vmem:[%s307 + $0x60] sm:%s300]
                %322 = vst [vmem:[%s308 + $0x30] sm:%s300] %v321
                %v323 = vld [vmem:[%s307 + $0x70] sm:%s300]
                %324 = vst [vmem:[%s308 + $0x38] sm:%s300] %v323
                %v325 = vld [vmem:[%s307 + $0x80] sm:%s300]
                %326 = vst [vmem:[%s308 + $0x40] sm:%s300] %v325
                %v327 = vld [vmem:[%s307 + $0x90] sm:%s300]
                %328 = vst [vmem:[%s308 + $0x48] sm:%s300] %v327
                %v329 = vld [vmem:[%s307 + $0xa0] sm:%s300]
                %330 = vst [vmem:[%s308 + $0x50] sm:%s300] %v329
                %v331 = vld [vmem:[%s307 + $0xb0] sm:%s300]
                %332 = vst [vmem:[%s308 + $0x58] sm:%s300] %v331
                %v333 = vld [vmem:[%s307 + $0xc0] sm:%s300]
                %334 = vst [vmem:[%s308 + $0x60] sm:%s300] %v333
                %v335 = vld [vmem:[%s307 + $0xd0] sm:%s300]
                %336 = vst [vmem:[%s308 + $0x68] sm:%s300] %v335
                %v337 = vld [vmem:[%s307 + $0xe0] sm:%s300]
                %338 = vst [vmem:[%s308 + $0x70] sm:%s300] %v337
                %v339 = vld [vmem:[%s307 + $0xf0] sm:%s300]
                %340 = vst [vmem:[%s308 + $0x78] sm:%s300] %v339
              $region79: #{feed_forward.1} parent=73 // loop_footer
                %s306 = sadd.s32 1, %s302
              $region80: #{feed_forward.1} parent=73 // loop_footer_branch
                %301 = sbr.rel target = $region76
              $region81: #{feed_forward.1} parent=73 // loop_exit
                _
            $region74: #{feed_forward.1} parent=65 // pred_fallthru
              _
          $region66: #{feed_forward.1} parent=61 // pred_fallthru
            _
          %385 = vnop
        $region62: #{feed_forward.1} parent=19 // pred_fallthru
          _
        // Predicated region
        $region97: #{feed_forward.1} parent=19 // pred_check
          %p386 = pneg %p120
        $region98: #{feed_forward.1} parent=19 // pred_check_branch
          %388 = sbr.rel (%p386) target = $region100
        $region99: #{feed_forward.1} parent=19 // pred_region
          %s389 = smul.u32 32, %s18
          %p390 = scmp.lt.s32.totalorder %s389, 63
          %s391 = scalar_select %p390, %s389, 63
          %s392 = smul.addr %s391, 4
          %s393 = scalar_lea.vmem %s3, %s392
          %s394 = smul.u32 32, %s18
        $region100: #{feed_forward.1} parent=19 // pred_fallthru
          _
      $region20: #{feed_forward.1} parent=5 // pred_fallthru
        _
      %p395 = scmp.le.s32.totalorder 1, %s10
      %p396 = scmp.lt.s32.totalorder %s10, 3
      %p397 = pnand %p395, %p396
      %p398 = pneg %p397
      // Predicated region
      $region101: #{feed_forward.1} parent=5 // pred_check
        _
      $region102: #{feed_forward.1} parent=5 // pred_check_branch
        %400 = sbr.rel (%p397) target = $region104
      $region103: #{feed_forward.1} parent=5 // pred_region
        %s401 = ssub.s32 %s10, 1
        %s402 = sand.u32 %s61, 1
        %s403 = sand.u32 %s61, 1
        %s404 = smul.addr %s403, 128
        %s405 = scalar_lea.vmem [#allocation3], %s404
        // Predicated region
        $region105: #{feed_forward.1} parent=103 // pred_check
          %p406 = pneg %p74
        $region106: #{feed_forward.1} parent=103 // pred_check_branch
          %408 = sbr.rel (%p406) target = $region108
        $region107: #{feed_forward.1} parent=103 // pred_region
          _
        $region108: #{feed_forward.1} parent=103 // pred_fallthru
          _
        %s409 = sand.u32 %s87, 1
        %s410 = sand.u32 %s87, 1
        %s411 = smul.addr %s410, 128
        %s412 = scalar_lea.vmem [#allocation4], %s411
        // Predicated region
        $region109: #{feed_forward.1} parent=103 // pred_check
          %p413 = pneg %p100
        $region110: #{feed_forward.1} parent=103 // pred_check_branch
          %415 = sbr.rel (%p413) target = $region112
        $region111: #{feed_forward.1} parent=103 // pred_region
          _
        $region112: #{feed_forward.1} parent=103 // pred_fallthru
          _
        %s416 = smul.u32 16, %s19
        %p417 = scmp.lt.s32.totalorder %s416, 15
        %s418 = scalar_select %p417, %s416, 15
        %s419 = smul.addr %s418, 4
        %s420 = scalar_lea.vmem %s0, %s419
        %p421 = pneg %p48
        %p422 = pneg %p45
        %s423 = sand.u32 %s61, 1
        %s424 = sand.u32 %s61, 1
        %s425 = smul.addr %s424, 128
        %s426 = scalar_lea.vmem [#allocation3], %s425
        %p427 = pneg %p74
        %p428 = pneg %p71
        %s429 = sand.u32 %s87, 1
        %s430 = sand.u32 %s87, 1
        %s431 = smul.addr %s430, 128
        %s432 = scalar_lea.vmem [#allocation4], %s431
        %p433 = pneg %p100
        %p434 = pneg %p97
        %s435 = smul.u32 32, %s20
        %p436 = scmp.lt.s32.totalorder %s435, 63
        %s437 = scalar_select %p436, %s435, 63
        %s438 = smul.addr %s437, 4
        %s439 = scalar_lea.vmem %s3, %s438
        %p440 = pneg %p126
        %p441 = pneg %p123
        %p442 = pneg %p152
        %p443 = pneg %p149
        %s444 = smul.u32 16, %s19
        %p445 = scmp.lt.s32.totalorder %s444, 15
        %s446 = scalar_select %p445, %s444, 15
        %s447 = smul.addr %s446, 8
        %s448 = scalar_lea.vmem %s4, %s447
        %s449 = smul.u32 16, %s19
        %p450 = scmp.lt.s32.totalorder %s449, 15
        %s451 = scalar_select %p450, %s449, 15
        %s452 = smul.addr %s451, 4
        %s453 = scalar_lea.vmem %s0, %s452
        %s454 = smul.u32 16, %s19
        %s455 = smul.u32 2, %s20
        %s456 = smul.u32 2, %s20
        %s457 = smul.u32 32, %s20
        %p458 = scmp.lt.s32.totalorder %s457, 63
        %s459 = scalar_select %p458, %s457, 63
        %s460 = smul.addr %s459, 4
        %s461 = scalar_lea.vmem %s3, %s460
        %s462 = smul.u32 32, %s20
        %s463 = smul.u32 16, %s19
        %p464 = scmp.lt.s32.totalorder %s463, 15
        %s465 = scalar_select %p464, %s463, 15
        %s466 = smul.addr %s465, 8
        %s467 = scalar_lea.vmem %s4, %s466
        %s468 = smul.u32 16, %s19
        %p470 = scmp.eq.s32.totalorder %s20, 0
        // Predicated region
        $region113: #{feed_forward.1} parent=103 // pred_check
          %p471 = pneg %p470
        $region114: #{feed_forward.1} parent=103 // pred_check_branch
          %473 = sbr.rel (%p471) target = $region116
        $region115: #{feed_forward.1} parent=103 // pred_region
          %474 = vst [vmem:[#allocation2] sm:$0xff] 0.0
          %475 = vst [vmem:[#allocation2 + $0x8] sm:$0xff] 0.0
          %476 = vst [vmem:[#allocation2 + $0x10] sm:$0xff] 0.0
          %477 = vst [vmem:[#allocation2 + $0x18] sm:$0xff] 0.0
          %478 = vst [vmem:[#allocation2 + $0x20] sm:$0xff] 0.0
          %479 = vst [vmem:[#allocation2 + $0x28] sm:$0xff] 0.0
          %480 = vst [vmem:[#allocation2 + $0x30] sm:$0xff] 0.0
          %481 = vst [vmem:[#allocation2 + $0x38] sm:$0xff] 0.0
          %482 = vst [vmem:[#allocation2 + $0x40] sm:$0xff] 0.0
          %483 = vst [vmem:[#allocation2 + $0x48] sm:$0xff] 0.0
          %484 = vst [vmem:[#allocation2 + $0x50] sm:$0xff] 0.0
          %485 = vst [vmem:[#allocation2 + $0x58] sm:$0xff] 0.0
          %486 = vst [vmem:[#allocation2 + $0x60] sm:$0xff] 0.0
          %487 = vst [vmem:[#allocation2 + $0x68] sm:$0xff] 0.0
          %488 = vst [vmem:[#allocation2 + $0x70] sm:$0xff] 0.0
          %489 = vst [vmem:[#allocation2 + $0x78] sm:$0xff] 0.0
        $region116: #{feed_forward.1} parent=103 // pred_fallthru
          _
        %v490 = vld [vmem:[%s453] sm:$0xf]
        %v491 = vld [vmem:[%s453 + $0x4] sm:$0xf]
        %v492 = vld [vmem:[%s453 + $0x8] sm:$0xf]
        %v493 = vld [vmem:[%s453 + $0xc] sm:$0xf]
        %v494 = vld [vmem:[%s453 + $0x10] sm:$0xf]
        %v495 = vld [vmem:[%s453 + $0x14] sm:$0xf]
        %v496 = vld [vmem:[%s453 + $0x18] sm:$0xf]
        %v497 = vld [vmem:[%s453 + $0x1c] sm:$0xf]
        %v498 = vld [vmem:[%s453 + $0x20] sm:$0xf]
        %v499 = vld [vmem:[%s453 + $0x24] sm:$0xf]
        %v500 = vld [vmem:[%s453 + $0x28] sm:$0xf]
        %v501 = vld [vmem:[%s453 + $0x2c] sm:$0xf]
        %v502 = vld [vmem:[%s453 + $0x30] sm:$0xf]
        %v503 = vld [vmem:[%s453 + $0x34] sm:$0xf]
        %v504 = vld [vmem:[%s453 + $0x38] sm:$0xf]
        %v505 = vld [vmem:[%s453 + $0x3c] sm:$0xf]
        %v506 = vld [vmem:[%s405] sm:$0xff]
        %v507 = vld [vmem:[%s405 + $0x8] sm:$0xff]
        %v508 = vld [vmem:[%s405 + $0x10] sm:$0xff]
        %v509 = vld [vmem:[%s405 + $0x18] sm:$0xff]
        %v510 = vld [vmem:[%s405 + $0x20] sm:$0xff]
        %v511 = vld [vmem:[%s405 + $0x28] sm:$0xff]
        %v512 = vld [vmem:[%s405 + $0x30] sm:$0xff]
        %v513 = vld [vmem:[%s405 + $0x38] sm:$0xff]
        %v514 = vld [vmem:[%s405 + $0x40] sm:$0xff]
        %v515 = vld [vmem:[%s405 + $0x48] sm:$0xff]
        %v516 = vld [vmem:[%s405 + $0x50] sm:$0xff]
        %v517 = vld [vmem:[%s405 + $0x58] sm:$0xff]
        %v518 = vld [vmem:[%s405 + $0x60] sm:$0xff]
        %v519 = vld [vmem:[%s405 + $0x68] sm:$0xff]
        %v520 = vld [vmem:[%s405 + $0x70] sm:$0xff]
        %v521 = vld [vmem:[%s405 + $0x78] sm:$0xff]
        %v538 = vunpack.c.l.b16 %v490
        %v539 = vunpack.c.l.b16 %v491
        %v540 = vunpack.c.l.b16 %v492
        %v541 = vunpack.c.l.b16 %v493
        %v542 = vunpack.c.l.b16 %v494
        %v543 = vunpack.c.l.b16 %v495
        %v544 = vunpack.c.l.b16 %v496
        %v545 = vunpack.c.l.b16 %v497
        %v546 = vunpack.c.l.b16 %v498
        %v547 = vunpack.c.l.b16 %v499
        %v548 = vunpack.c.l.b16 %v500
        %v549 = vunpack.c.l.b16 %v501
        %v550 = vunpack.c.l.b16 %v502
        %v551 = vunpack.c.l.b16 %v503
        %v552 = vunpack.c.l.b16 %v504
        %v553 = vunpack.c.l.b16 %v505
        %v554 = vpack.c.b16 %v539, %v538
        %v555 = vpack.c.b16 %v541, %v540
        %v556 = vpack.c.b16 %v543, %v542
        %v557 = vpack.c.b16 %v545, %v544
        %v558 = vpack.c.b16 %v547, %v546
        %v559 = vpack.c.b16 %v549, %v548
        %v560 = vpack.c.b16 %v551, %v550
        %v561 = vpack.c.b16 %v553, %v552
        %v586 = vunpack.c.l.b16 %v506
        %v587 = vunpack.c.h.b16 %v506
        %v588 = vunpack.c.l.b16 %v507
        %v589 = vunpack.c.h.b16 %v507
        %v590 = vunpack.c.l.b16 %v508
        %v591 = vunpack.c.h.b16 %v508
        %v592 = vunpack.c.l.b16 %v509
        %v593 = vunpack.c.h.b16 %v509
        %v594 = vunpack.c.l.b16 %v510
        %v595 = vunpack.c.h.b16 %v510
        %v596 = vunpack.c.l.b16 %v511
        %v597 = vunpack.c.h.b16 %v511
        %v598 = vunpack.c.l.b16 %v512
        %v599 = vunpack.c.h.b16 %v512
        %v600 = vunpack.c.l.b16 %v513
        %v601 = vunpack.c.h.b16 %v513
        %v602 = vunpack.c.l.b16 %v514
        %v603 = vunpack.c.h.b16 %v514
        %v604 = vunpack.c.l.b16 %v515
        %v605 = vunpack.c.h.b16 %v515
        %v606 = vunpack.c.l.b16 %v516
        %v607 = vunpack.c.h.b16 %v516
        %v608 = vunpack.c.l.b16 %v517
        %v609 = vunpack.c.h.b16 %v517
        %v610 = vunpack.c.l.b16 %v518
        %v611 = vunpack.c.h.b16 %v518
        %v612 = vunpack.c.l.b16 %v519
        %v613 = vunpack.c.h.b16 %v519
        %v614 = vunpack.c.l.b16 %v520
        %v615 = vunpack.c.h.b16 %v520
        %v616 = vunpack.c.l.b16 %v521
        %v617 = vunpack.c.h.b16 %v521
        %v618 = vpack.c.b16 %v588, %v586
        %v619 = vpack.c.b16 %v589, %v587
        %v620 = vpack.c.b16 %v592, %v590
        %v621 = vpack.c.b16 %v593, %v591
        %v622 = vpack.c.b16 %v596, %v594
        %v623 = vpack.c.b16 %v597, %v595
        %v624 = vpack.c.b16 %v600, %v598
        %v625 = vpack.c.b16 %v601, %v599
        %v626 = vpack.c.b16 %v604, %v602
        %v627 = vpack.c.b16 %v605, %v603
        %v628 = vpack.c.b16 %v608, %v606
        %v629 = vpack.c.b16 %v609, %v607
        %v630 = vpack.c.b16 %v612, %v610
        %v631 = vpack.c.b16 %v613, %v611
        %v632 = vpack.c.b16 %v616, %v614
        %v633 = vpack.c.b16 %v617, %v615
        %650 = vmatprep.subr.bf16.mxu0 %v633
        %651 = vmatpush1.bf16.msra.mxu0 %v632
        %652 = vmatprep.subr.bf16.mxu0 %v631
        %653 = vmatpush1.bf16.msra.mxu0 %v630
        %654 = vmatprep.subr.bf16.mxu0 %v629
        %655 = vmatpush1.bf16.msra.mxu0 %v628
        %656 = vmatprep.subr.bf16.mxu0 %v627
        %657 = vmatpush1.bf16.msra.mxu0 %v626
        %658 = vmatprep.subr.bf16.mxu0 %v625
        %659 = vmatpush1.bf16.msra.mxu0 %v624
        %660 = vmatprep.subr.bf16.mxu0 %v623
        %661 = vmatpush1.bf16.msra.mxu0 %v622
        %662 = vmatprep.subr.bf16.mxu0 %v621
        %663 = vmatpush1.bf16.msra.mxu0 %v620
        %664 = vmatprep.subr.bf16.mxu0 %v619
        %665 = vmatpush1.bf16.msra.mxu0 %v618
        %666 = vmatprep.subr.bf16.mxu0 0
        %667 = vmatpush2.bf16.msra.mxu0 0
        %668 = vmatprep.subr.bf16.mxu0 0
        %669 = vmatpush2.bf16.msra.mxu0 0
        %670 = vmatprep.subr.bf16.mxu0 0
        %671 = vmatpush2.bf16.msra.mxu0 0
        %672 = vmatprep.subr.bf16.mxu0 0
        %673 = vmatpush2.bf16.msra.mxu0 0
        %674 = vmatprep.subr.bf16.mxu0 0
        %675 = vmatpush2.bf16.msra.mxu0 0
        %676 = vmatprep.subr.bf16.mxu0 0
        %677 = vmatpush2.bf16.msra.mxu0 0
        %678 = vmatprep.subr.bf16.mxu0 0
        %679 = vmatpush2.bf16.msra.mxu0 0
        %680 = vmatprep.subr.bf16.mxu0 0
        %681 = vmatpush2.bf16.msra.mxu0 0
        %682 = vmatprep.mubr.bf16.mxu0 0
        %683 = vmatmul.mubr.bf16.gmra.mxu0 %v554
        %v684 = vpop.f32.mrf.mxu0
        %v685 = vadd.f32 0.0, %v684
        %v686 = vpop.f32.mrf.mxu0
        %v687 = vadd.f32 0.0, %v686
        %v688 = vpop.f32.mrf.mxu0
        %v689 = vadd.f32 0.0, %v688
        %v690 = vpop.f32.mrf.mxu0
        %v691 = vadd.f32 0.0, %v690
        %692 = vmatprep.mubr.bf16.mxu0 0
        %693 = vmatmul.mubr.bf16.gmra.mxu0 %v555
        %v694 = vpop.f32.mrf.mxu0
        %v695 = vadd.f32 0.0, %v694
        %v696 = vpop.f32.mrf.mxu0
        %v697 = vadd.f32 0.0, %v696
        %v698 = vpop.f32.mrf.mxu0
        %v699 = vadd.f32 0.0, %v698
        %v700 = vpop.f32.mrf.mxu0
        %v701 = vadd.f32 0.0, %v700
        %702 = vmatprep.mubr.bf16.mxu0 0
        %703 = vmatmul.mubr.bf16.gmra.mxu0 %v556
        %v704 = vpop.f32.mrf.mxu0
        %v705 = vadd.f32 0.0, %v704
        %v706 = vpop.f32.mrf.mxu0
        %v707 = vadd.f32 0.0, %v706
        %v708 = vpop.f32.mrf.mxu0
        %v709 = vadd.f32 0.0, %v708
        %v710 = vpop.f32.mrf.mxu0
        %v711 = vadd.f32 0.0, %v710
        %712 = vmatprep.mubr.bf16.mxu0 0
        %713 = vmatmul.mubr.bf16.gmra.mxu0 %v557
        %v714 = vpop.f32.mrf.mxu0
        %v715 = vadd.f32 0.0, %v714
        %v716 = vpop.f32.mrf.mxu0
        %v717 = vadd.f32 0.0, %v716
        %v718 = vpop.f32.mrf.mxu0
        %v719 = vadd.f32 0.0, %v718
        %v720 = vpop.f32.mrf.mxu0
        %v721 = vadd.f32 0.0, %v720
        %722 = vmatprep.mubr.bf16.mxu0 0
        %723 = vmatmul.mubr.bf16.gmra.mxu0 %v558
        %v724 = vpop.f32.mrf.mxu0
        %v725 = vadd.f32 0.0, %v724
        %v726 = vpop.f32.mrf.mxu0
        %v727 = vadd.f32 0.0, %v726
        %v728 = vpop.f32.mrf.mxu0
        %v729 = vadd.f32 0.0, %v728
        %v730 = vpop.f32.mrf.mxu0
        %v731 = vadd.f32 0.0, %v730
        %732 = vmatprep.mubr.bf16.mxu0 0
        %733 = vmatmul.mubr.bf16.gmra.mxu0 %v559
        %v734 = vpop.f32.mrf.mxu0
        %v735 = vadd.f32 0.0, %v734
        %v736 = vpop.f32.mrf.mxu0
        %v737 = vadd.f32 0.0, %v736
        %v738 = vpop.f32.mrf.mxu0
        %v739 = vadd.f32 0.0, %v738
        %v740 = vpop.f32.mrf.mxu0
        %v741 = vadd.f32 0.0, %v740
        %742 = vmatprep.mubr.bf16.mxu0 0
        %743 = vmatmul.mubr.bf16.gmra.mxu0 %v560
        %v744 = vpop.f32.mrf.mxu0
        %v745 = vadd.f32 0.0, %v744
        %v746 = vpop.f32.mrf.mxu0
        %v747 = vadd.f32 0.0, %v746
        %v748 = vpop.f32.mrf.mxu0
        %v749 = vadd.f32 0.0, %v748
        %v750 = vpop.f32.mrf.mxu0
        %v751 = vadd.f32 0.0, %v750
        %752 = vmatprep.mubr.bf16.mxu0 0
        %753 = vmatmul.mubr.bf16.gmra.mxu0 %v561
        %v754 = vpop.f32.mrf.mxu0
        %v755 = vadd.f32 0.0, %v754
        %v756 = vpop.f32.mrf.mxu0
        %v757 = vadd.f32 0.0, %v756
        %v758 = vpop.f32.mrf.mxu0
        %v759 = vadd.f32 0.0, %v758
        %v760 = vpop.f32.mrf.mxu0
        %v761 = vadd.f32 0.0, %v760
        %762 = vdwg.mxu0
        %v763 = vld [vmem:[%s412] sm:$0xff]
        %v764 = vld [vmem:[%s412 + $0x8] sm:$0xff]
        %v765 = vld [vmem:[%s412 + $0x10] sm:$0xff]
        %v766 = vld [vmem:[%s412 + $0x18] sm:$0xff]
        %v767 = vld [vmem:[%s412 + $0x20] sm:$0xff]
        %v768 = vld [vmem:[%s412 + $0x28] sm:$0xff]
        %v769 = vld [vmem:[%s412 + $0x30] sm:$0xff]
        %v770 = vld [vmem:[%s412 + $0x38] sm:$0xff]
        %v771 = vld [vmem:[%s412 + $0x40] sm:$0xff]
        %v772 = vld [vmem:[%s412 + $0x48] sm:$0xff]
        %v773 = vld [vmem:[%s412 + $0x50] sm:$0xff]
        %v774 = vld [vmem:[%s412 + $0x58] sm:$0xff]
        %v775 = vld [vmem:[%s412 + $0x60] sm:$0xff]
        %v776 = vld [vmem:[%s412 + $0x68] sm:$0xff]
        %v777 = vld [vmem:[%s412 + $0x70] sm:$0xff]
        %v778 = vld [vmem:[%s412 + $0x78] sm:$0xff]
        %v795 = vunpack.c.l.b16 %v763
        %v796 = vunpack.c.h.b16 %v763
        %v797 = vunpack.c.l.b16 %v764
        %v798 = vunpack.c.h.b16 %v764
        %v799 = vunpack.c.l.b16 %v765
        %v800 = vunpack.c.h.b16 %v765
        %v801 = vunpack.c.l.b16 %v766
        %v802 = vunpack.c.h.b16 %v766
        %v803 = vunpack.c.l.b16 %v767
        %v804 = vunpack.c.h.b16 %v767
        %v805 = vunpack.c.l.b16 %v768
        %v806 = vunpack.c.h.b16 %v768
        %v807 = vunpack.c.l.b16 %v769
        %v808 = vunpack.c.h.b16 %v769
        %v809 = vunpack.c.l.b16 %v770
        %v810 = vunpack.c.h.b16 %v770
        %v811 = vunpack.c.l.b16 %v771
        %v812 = vunpack.c.h.b16 %v771
        %v813 = vunpack.c.l.b16 %v772
        %v814 = vunpack.c.h.b16 %v772
        %v815 = vunpack.c.l.b16 %v773
        %v816 = vunpack.c.h.b16 %v773
        %v817 = vunpack.c.l.b16 %v774
        %v818 = vunpack.c.h.b16 %v774
        %v819 = vunpack.c.l.b16 %v775
        %v820 = vunpack.c.h.b16 %v775
        %v821 = vunpack.c.l.b16 %v776
        %v822 = vunpack.c.h.b16 %v776
        %v823 = vunpack.c.l.b16 %v777
        %v824 = vunpack.c.h.b16 %v777
        %v825 = vunpack.c.l.b16 %v778
        %v826 = vunpack.c.h.b16 %v778
        %v827 = vpack.c.b16 %v797, %v795
        %v828 = vpack.c.b16 %v798, %v796
        %v829 = vpack.c.b16 %v801, %v799
        %v830 = vpack.c.b16 %v802, %v800
        %v831 = vpack.c.b16 %v805, %v803
        %v832 = vpack.c.b16 %v806, %v804
        %v833 = vpack.c.b16 %v809, %v807
        %v834 = vpack.c.b16 %v810, %v808
        %v835 = vpack.c.b16 %v813, %v811
        %v836 = vpack.c.b16 %v814, %v812
        %v837 = vpack.c.b16 %v817, %v815
        %v838 = vpack.c.b16 %v818, %v816
        %v839 = vpack.c.b16 %v821, %v819
        %v840 = vpack.c.b16 %v822, %v820
        %v841 = vpack.c.b16 %v825, %v823
        %v842 = vpack.c.b16 %v826, %v824
        %859 = vmatprep.subr.bf16.mxu0 %v842
        %860 = vmatpush1.bf16.msra.mxu0 %v841
        %861 = vmatprep.subr.bf16.mxu0 %v840
        %862 = vmatpush1.bf16.msra.mxu0 %v839
        %863 = vmatprep.subr.bf16.mxu0 %v838
        %864 = vmatpush1.bf16.msra.mxu0 %v837
        %865 = vmatprep.subr.bf16.mxu0 %v836
        %866 = vmatpush1.bf16.msra.mxu0 %v835
        %867 = vmatprep.subr.bf16.mxu0 %v834
        %868 = vmatpush1.bf16.msra.mxu0 %v833
        %869 = vmatprep.subr.bf16.mxu0 %v832
        %870 = vmatpush1.bf16.msra.mxu0 %v831
        %871 = vmatprep.subr.bf16.mxu0 %v830
        %872 = vmatpush1.bf16.msra.mxu0 %v829
        %873 = vmatprep.subr.bf16.mxu0 %v828
        %874 = vmatpush1.bf16.msra.mxu0 %v827
        %875 = vmatprep.subr.bf16.mxu0 0
        %876 = vmatpush2.bf16.msra.mxu0 0
        %877 = vmatprep.subr.bf16.mxu0 0
        %878 = vmatpush2.bf16.msra.mxu0 0
        %879 = vmatprep.subr.bf16.mxu0 0
        %880 = vmatpush2.bf16.msra.mxu0 0
        %881 = vmatprep.subr.bf16.mxu0 0
        %882 = vmatpush2.bf16.msra.mxu0 0
        %883 = vmatprep.subr.bf16.mxu0 0
        %884 = vmatpush2.bf16.msra.mxu0 0
        %885 = vmatprep.subr.bf16.mxu0 0
        %886 = vmatpush2.bf16.msra.mxu0 0
        %887 = vmatprep.subr.bf16.mxu0 0
        %888 = vmatpush2.bf16.msra.mxu0 0
        %889 = vmatprep.subr.bf16.mxu0 0
        %890 = vmatpush2.bf16.msra.mxu0 0
        %891 = vmatprep.mubr.bf16.mxu0 0
        %892 = vmatmul.mubr.bf16.gmra.mxu0 %v554
        %v893 = vpop.f32.mrf.mxu0
        %v894 = vadd.f32 0.0, %v893
        %v895 = vpop.f32.mrf.mxu0
        %v896 = vadd.f32 0.0, %v895
        %v897 = vpop.f32.mrf.mxu0
        %v898 = vadd.f32 0.0, %v897
        %v899 = vpop.f32.mrf.mxu0
        %v900 = vadd.f32 0.0, %v899
        %901 = vmatprep.mubr.bf16.mxu0 0
        %902 = vmatmul.mubr.bf16.gmra.mxu0 %v555
        %v903 = vpop.f32.mrf.mxu0
        %v904 = vadd.f32 0.0, %v903
        %v905 = vpop.f32.mrf.mxu0
        %v906 = vadd.f32 0.0, %v905
        %v907 = vpop.f32.mrf.mxu0
        %v908 = vadd.f32 0.0, %v907
        %v909 = vpop.f32.mrf.mxu0
        %v910 = vadd.f32 0.0, %v909
        %911 = vmatprep.mubr.bf16.mxu0 0
        %912 = vmatmul.mubr.bf16.gmra.mxu0 %v556
        %v913 = vpop.f32.mrf.mxu0
        %v914 = vadd.f32 0.0, %v913
        %v915 = vpop.f32.mrf.mxu0
        %v916 = vadd.f32 0.0, %v915
        %v917 = vpop.f32.mrf.mxu0
        %v918 = vadd.f32 0.0, %v917
        %v919 = vpop.f32.mrf.mxu0
        %v920 = vadd.f32 0.0, %v919
        %921 = vmatprep.mubr.bf16.mxu0 0
        %922 = vmatmul.mubr.bf16.gmra.mxu0 %v557
        %v923 = vpop.f32.mrf.mxu0
        %v924 = vadd.f32 0.0, %v923
        %v925 = vpop.f32.mrf.mxu0
        %v926 = vadd.f32 0.0, %v925
        %v927 = vpop.f32.mrf.mxu0
        %v928 = vadd.f32 0.0, %v927
        %v929 = vpop.f32.mrf.mxu0
        %v930 = vadd.f32 0.0, %v929
        %931 = vmatprep.mubr.bf16.mxu0 0
        %932 = vmatmul.mubr.bf16.gmra.mxu0 %v558
        %v933 = vpop.f32.mrf.mxu0
        %v934 = vadd.f32 0.0, %v933
        %v935 = vpop.f32.mrf.mxu0
        %v936 = vadd.f32 0.0, %v935
        %v937 = vpop.f32.mrf.mxu0
        %v938 = vadd.f32 0.0, %v937
        %v939 = vpop.f32.mrf.mxu0
        %v940 = vadd.f32 0.0, %v939
        %941 = vmatprep.mubr.bf16.mxu0 0
        %942 = vmatmul.mubr.bf16.gmra.mxu0 %v559
        %v943 = vpop.f32.mrf.mxu0
        %v944 = vadd.f32 0.0, %v943
        %v945 = vpop.f32.mrf.mxu0
        %v946 = vadd.f32 0.0, %v945
        %v947 = vpop.f32.mrf.mxu0
        %v948 = vadd.f32 0.0, %v947
        %v949 = vpop.f32.mrf.mxu0
        %v950 = vadd.f32 0.0, %v949
        %951 = vmatprep.mubr.bf16.mxu0 0
        %952 = vmatmul.mubr.bf16.gmra.mxu0 %v560
        %v953 = vpop.f32.mrf.mxu0
        %v954 = vadd.f32 0.0, %v953
        %v955 = vpop.f32.mrf.mxu0
        %v956 = vadd.f32 0.0, %v955
        %v957 = vpop.f32.mrf.mxu0
        %v958 = vadd.f32 0.0, %v957
        %v959 = vpop.f32.mrf.mxu0
        %v960 = vadd.f32 0.0, %v959
        %961 = vmatprep.mubr.bf16.mxu0 0
        %962 = vmatmul.mubr.bf16.gmra.mxu0 %v561
        %v963 = vpop.f32.mrf.mxu0
        %v964 = vadd.f32 0.0, %v963
        %v965 = vpop.f32.mrf.mxu0
        %v966 = vadd.f32 0.0, %v965
        %v967 = vpop.f32.mrf.mxu0
        %v968 = vadd.f32 0.0, %v967
        %v969 = vpop.f32.mrf.mxu0
        %v970 = vadd.f32 0.0, %v969
        %971 = vdwg.mxu0
        %v972 = vxor.u32 %v685, 2147483648
        %v973 = vxor.u32 %v687, 2147483648
        %v974 = vxor.u32 %v689, 2147483648
        %v975 = vxor.u32 %v691, 2147483648
        %v976 = vxor.u32 %v695, 2147483648
        %v977 = vxor.u32 %v697, 2147483648
        %v978 = vxor.u32 %v699, 2147483648
        %v979 = vxor.u32 %v701, 2147483648
        %v980 = vxor.u32 %v705, 2147483648
        %v981 = vxor.u32 %v707, 2147483648
        %v982 = vxor.u32 %v709, 2147483648
        %v983 = vxor.u32 %v711, 2147483648
        %v984 = vxor.u32 %v715, 2147483648
        %v985 = vxor.u32 %v717, 2147483648
        %v986 = vxor.u32 %v719, 2147483648
        %v987 = vxor.u32 %v721, 2147483648
        %v988 = vxor.u32 %v725, 2147483648
        %v989 = vxor.u32 %v727, 2147483648
        %v990 = vxor.u32 %v729, 2147483648
        %v991 = vxor.u32 %v731, 2147483648
        %v992 = vxor.u32 %v735, 2147483648
        %v993 = vxor.u32 %v737, 2147483648
        %v994 = vxor.u32 %v739, 2147483648
        %v995 = vxor.u32 %v741, 2147483648
        %v996 = vxor.u32 %v745, 2147483648
        %v997 = vxor.u32 %v747, 2147483648
        %v998 = vxor.u32 %v749, 2147483648
        %v999 = vxor.u32 %v751, 2147483648
        %v1000 = vxor.u32 %v755, 2147483648
        %v1001 = vxor.u32 %v757, 2147483648
        %v1002 = vxor.u32 %v759, 2147483648
        %v1003 = vxor.u32 %v761, 2147483648
        %v1004 = vmul.f32 %v972, 1.442695
        %v1005 = vpow.pop %v1004
        %v1006 = vmul.f32 %v973, 1.442695
        %v1007 = vpow.pop %v1006
        %v1008 = vmul.f32 %v974, 1.442695
        %v1009 = vpow.pop %v1008
        %v1010 = vmul.f32 %v975, 1.442695
        %v1011 = vpow.pop %v1010
        %v1012 = vmul.f32 %v976, 1.442695
        %v1013 = vpow.pop %v1012
        %v1014 = vmul.f32 %v977, 1.442695
        %v1015 = vpow.pop %v1014
        %v1016 = vmul.f32 %v978, 1.442695
        %v1017 = vpow.pop %v1016
        %v1018 = vmul.f32 %v979, 1.442695
        %v1019 = vpow.pop %v1018
        %v1020 = vmul.f32 %v980, 1.442695
        %v1021 = vpow.pop %v1020
        %v1022 = vmul.f32 %v981, 1.442695
        %v1023 = vpow.pop %v1022
        %v1024 = vmul.f32 %v982, 1.442695
        %v1025 = vpow.pop %v1024
        %v1026 = vmul.f32 %v983, 1.442695
        %v1027 = vpow.pop %v1026
        %v1028 = vmul.f32 %v984, 1.442695
        %v1029 = vpow.pop %v1028
        %v1030 = vmul.f32 %v985, 1.442695
        %v1031 = vpow.pop %v1030
        %v1032 = vmul.f32 %v986, 1.442695
        %v1033 = vpow.pop %v1032
        %v1034 = vmul.f32 %v987, 1.442695
        %v1035 = vpow.pop %v1034
        %v1036 = vmul.f32 %v988, 1.442695
        %v1037 = vpow.pop %v1036
        %v1038 = vmul.f32 %v989, 1.442695
        %v1039 = vpow.pop %v1038
        %v1040 = vmul.f32 %v990, 1.442695
        %v1041 = vpow.pop %v1040
        %v1042 = vmul.f32 %v991, 1.442695
        %v1043 = vpow.pop %v1042
        %v1044 = vmul.f32 %v992, 1.442695
        %v1045 = vpow.pop %v1044
        %v1046 = vmul.f32 %v993, 1.442695
        %v1047 = vpow.pop %v1046
        %v1048 = vmul.f32 %v994, 1.442695
        %v1049 = vpow.pop %v1048
        %v1050 = vmul.f32 %v995, 1.442695
        %v1051 = vpow.pop %v1050
        %v1052 = vmul.f32 %v996, 1.442695
        %v1053 = vpow.pop %v1052
        %v1054 = vmul.f32 %v997, 1.442695
        %v1055 = vpow.pop %v1054
        %v1056 = vmul.f32 %v998, 1.442695
        %v1057 = vpow.pop %v1056
        %v1058 = vmul.f32 %v999, 1.442695
        %v1059 = vpow.pop %v1058
        %v1060 = vmul.f32 %v1000, 1.442695
        %v1061 = vpow.pop %v1060
        %v1062 = vmul.f32 %v1001, 1.442695
        %v1063 = vpow.pop %v1062
        %v1064 = vmul.f32 %v1002, 1.442695
        %v1065 = vpow.pop %v1064
        %v1066 = vmul.f32 %v1003, 1.442695
        %v1067 = vpow.pop %v1066
        %v1068 = vadd.f32 %v1005, 1.0
        %v1069 = vadd.f32 %v1007, 1.0
        %v1070 = vadd.f32 %v1009, 1.0
        %v1071 = vadd.f32 %v1011, 1.0
        %v1072 = vadd.f32 %v1013, 1.0
        %v1073 = vadd.f32 %v1015, 1.0
        %v1074 = vadd.f32 %v1017, 1.0
        %v1075 = vadd.f32 %v1019, 1.0
        %v1076 = vadd.f32 %v1021, 1.0
        %v1077 = vadd.f32 %v1023, 1.0
        %v1078 = vadd.f32 %v1025, 1.0
        %v1079 = vadd.f32 %v1027, 1.0
        %v1080 = vadd.f32 %v1029, 1.0
        %v1081 = vadd.f32 %v1031, 1.0
        %v1082 = vadd.f32 %v1033, 1.0
        %v1083 = vadd.f32 %v1035, 1.0
        %v1084 = vadd.f32 %v1037, 1.0
        %v1085 = vadd.f32 %v1039, 1.0
        %v1086 = vadd.f32 %v1041, 1.0
        %v1087 = vadd.f32 %v1043, 1.0
        %v1088 = vadd.f32 %v1045, 1.0
        %v1089 = vadd.f32 %v1047, 1.0
        %v1090 = vadd.f32 %v1049, 1.0
        %v1091 = vadd.f32 %v1051, 1.0
        %v1092 = vadd.f32 %v1053, 1.0
        %v1093 = vadd.f32 %v1055, 1.0
        %v1094 = vadd.f32 %v1057, 1.0
        %v1095 = vadd.f32 %v1059, 1.0
        %v1096 = vadd.f32 %v1061, 1.0
        %v1097 = vadd.f32 %v1063, 1.0
        %v1098 = vadd.f32 %v1065, 1.0
        %v1099 = vadd.f32 %v1067, 1.0
        %v1100 = vrcp.pop %v1068
        %v1101 = vmul.f32 1.0, %v1100
        %v1102 = vrcp.pop %v1069
        %v1103 = vmul.f32 1.0, %v1102
        %v1104 = vrcp.pop %v1070
        %v1105 = vmul.f32 1.0, %v1104
        %v1106 = vrcp.pop %v1071
        %v1107 = vmul.f32 1.0, %v1106
        %v1108 = vrcp.pop %v1072
        %v1109 = vmul.f32 1.0, %v1108
        %v1110 = vrcp.pop %v1073
        %v1111 = vmul.f32 1.0, %v1110
        %v1112 = vrcp.pop %v1074
        %v1113 = vmul.f32 1.0, %v1112
        %v1114 = vrcp.pop %v1075
        %v1115 = vmul.f32 1.0, %v1114
        %v1116 = vrcp.pop %v1076
        %v1117 = vmul.f32 1.0, %v1116
        %v1118 = vrcp.pop %v1077
        %v1119 = vmul.f32 1.0, %v1118
        %v1120 = vrcp.pop %v1078
        %v1121 = vmul.f32 1.0, %v1120
        %v1122 = vrcp.pop %v1079
        %v1123 = vmul.f32 1.0, %v1122
        %v1124 = vrcp.pop %v1080
        %v1125 = vmul.f32 1.0, %v1124
        %v1126 = vrcp.pop %v1081
        %v1127 = vmul.f32 1.0, %v1126
        %v1128 = vrcp.pop %v1082
        %v1129 = vmul.f32 1.0, %v1128
        %v1130 = vrcp.pop %v1083
        %v1131 = vmul.f32 1.0, %v1130
        %v1132 = vrcp.pop %v1084
        %v1133 = vmul.f32 1.0, %v1132
        %v1134 = vrcp.pop %v1085
        %v1135 = vmul.f32 1.0, %v1134
        %v1136 = vrcp.pop %v1086
        %v1137 = vmul.f32 1.0, %v1136
        %v1138 = vrcp.pop %v1087
        %v1139 = vmul.f32 1.0, %v1138
        %v1140 = vrcp.pop %v1088
        %v1141 = vmul.f32 1.0, %v1140
        %v1142 = vrcp.pop %v1089
        %v1143 = vmul.f32 1.0, %v1142
        %v1144 = vrcp.pop %v1090
        %v1145 = vmul.f32 1.0, %v1144
        %v1146 = vrcp.pop %v1091
        %v1147 = vmul.f32 1.0, %v1146
        %v1148 = vrcp.pop %v1092
        %v1149 = vmul.f32 1.0, %v1148
        %v1150 = vrcp.pop %v1093
        %v1151 = vmul.f32 1.0, %v1150
        %v1152 = vrcp.pop %v1094
        %v1153 = vmul.f32 1.0, %v1152
        %v1154 = vrcp.pop %v1095
        %v1155 = vmul.f32 1.0, %v1154
        %v1156 = vrcp.pop %v1096
        %v1157 = vmul.f32 1.0, %v1156
        %v1158 = vrcp.pop %v1097
        %v1159 = vmul.f32 1.0, %v1158
        %v1160 = vrcp.pop %v1098
        %v1161 = vmul.f32 1.0, %v1160
        %v1162 = vrcp.pop %v1099
        %v1163 = vmul.f32 1.0, %v1162
        %v1164 = vmul.f32 %v685, %v1101
        %v1165 = vmul.f32 %v687, %v1103
        %v1166 = vmul.f32 %v689, %v1105
        %v1167 = vmul.f32 %v691, %v1107
        %v1168 = vmul.f32 %v695, %v1109
        %v1169 = vmul.f32 %v697, %v1111
        %v1170 = vmul.f32 %v699, %v1113
        %v1171 = vmul.f32 %v701, %v1115
        %v1172 = vmul.f32 %v705, %v1117
        %v1173 = vmul.f32 %v707, %v1119
        %v1174 = vmul.f32 %v709, %v1121
        %v1175 = vmul.f32 %v711, %v1123
        %v1176 = vmul.f32 %v715, %v1125
        %v1177 = vmul.f32 %v717, %v1127
        %v1178 = vmul.f32 %v719, %v1129
        %v1179 = vmul.f32 %v721, %v1131
        %v1180 = vmul.f32 %v725, %v1133
        %v1181 = vmul.f32 %v727, %v1135
        %v1182 = vmul.f32 %v729, %v1137
        %v1183 = vmul.f32 %v731, %v1139
        %v1184 = vmul.f32 %v735, %v1141
        %v1185 = vmul.f32 %v737, %v1143
        %v1186 = vmul.f32 %v739, %v1145
        %v1187 = vmul.f32 %v741, %v1147
        %v1188 = vmul.f32 %v745, %v1149
        %v1189 = vmul.f32 %v747, %v1151
        %v1190 = vmul.f32 %v749, %v1153
        %v1191 = vmul.f32 %v751, %v1155
        %v1192 = vmul.f32 %v755, %v1157
        %v1193 = vmul.f32 %v757, %v1159
        %v1194 = vmul.f32 %v759, %v1161
        %v1195 = vmul.f32 %v761, %v1163
        %v1196 = vmul.f32 %v1164, %v894
        %v1197 = vmul.f32 %v1165, %v896
        %v1198 = vmul.f32 %v1166, %v898
        %v1199 = vmul.f32 %v1167, %v900
        %v1200 = vmul.f32 %v1168, %v904
        %v1201 = vmul.f32 %v1169, %v906
        %v1202 = vmul.f32 %v1170, %v908
        %v1203 = vmul.f32 %v1171, %v910
        %v1204 = vmul.f32 %v1172, %v914
        %v1205 = vmul.f32 %v1173, %v916
        %v1206 = vmul.f32 %v1174, %v918
        %v1207 = vmul.f32 %v1175, %v920
        %v1208 = vmul.f32 %v1176, %v924
        %v1209 = vmul.f32 %v1177, %v926
        %v1210 = vmul.f32 %v1178, %v928
        %v1211 = vmul.f32 %v1179, %v930
        %v1212 = vmul.f32 %v1180, %v934
        %v1213 = vmul.f32 %v1181, %v936
        %v1214 = vmul.f32 %v1182, %v938
        %v1215 = vmul.f32 %v1183, %v940
        %v1216 = vmul.f32 %v1184, %v944
        %v1217 = vmul.f32 %v1185, %v946
        %v1218 = vmul.f32 %v1186, %v948
        %v1219 = vmul.f32 %v1187, %v950
        %v1220 = vmul.f32 %v1188, %v954
        %v1221 = vmul.f32 %v1189, %v956
        %v1222 = vmul.f32 %v1190, %v958
        %v1223 = vmul.f32 %v1191, %v960
        %v1224 = vmul.f32 %v1192, %v964
        %v1225 = vmul.f32 %v1193, %v966
        %v1226 = vmul.f32 %v1194, %v968
        %v1227 = vmul.f32 %v1195, %v970
        %v1228 = vpack.c.bf16 %v1198, %v1196
        %v1229 = vpack.c.bf16 %v1199, %v1197
        %v1230 = vpack.c.bf16 %v1202, %v1200
        %v1231 = vpack.c.bf16 %v1203, %v1201
        %v1232 = vpack.c.bf16 %v1206, %v1204
        %v1233 = vpack.c.bf16 %v1207, %v1205
        %v1234 = vpack.c.bf16 %v1210, %v1208
        %v1235 = vpack.c.bf16 %v1211, %v1209
        %v1236 = vpack.c.bf16 %v1214, %v1212
        %v1237 = vpack.c.bf16 %v1215, %v1213
        %v1238 = vpack.c.bf16 %v1218, %v1216
        %v1239 = vpack.c.bf16 %v1219, %v1217
        %v1240 = vpack.c.bf16 %v1222, %v1220
        %v1241 = vpack.c.bf16 %v1223, %v1221
        %v1242 = vpack.c.bf16 %v1226, %v1224
        %v1243 = vpack.c.bf16 %v1227, %v1225
        %v1244 = vld [vmem:[#allocation2] sm:$0xff]
        %v1245 = vld [vmem:[#allocation2 + $0x8] sm:$0xff]
        %v1246 = vld [vmem:[#allocation2 + $0x10] sm:$0xff]
        %v1247 = vld [vmem:[#allocation2 + $0x18] sm:$0xff]
        %v1248 = vld [vmem:[#allocation2 + $0x20] sm:$0xff]
        %v1249 = vld [vmem:[#allocation2 + $0x28] sm:$0xff]
        %v1250 = vld [vmem:[#allocation2 + $0x30] sm:$0xff]
        %v1251 = vld [vmem:[#allocation2 + $0x38] sm:$0xff]
        %v1252 = vld [vmem:[#allocation2 + $0x40] sm:$0xff]
        %v1253 = vld [vmem:[#allocation2 + $0x48] sm:$0xff]
        %v1254 = vld [vmem:[#allocation2 + $0x50] sm:$0xff]
        %v1255 = vld [vmem:[#allocation2 + $0x58] sm:$0xff]
        %v1256 = vld [vmem:[#allocation2 + $0x60] sm:$0xff]
        %v1257 = vld [vmem:[#allocation2 + $0x68] sm:$0xff]
        %v1258 = vld [vmem:[#allocation2 + $0x70] sm:$0xff]
        %v1259 = vld [vmem:[#allocation2 + $0x78] sm:$0xff]
        %v1260 = vld [vmem:[%s461] sm:$0xf]
        %v1261 = vld [vmem:[%s461 + $0x4] sm:$0xf]
        %v1262 = vld [vmem:[%s461 + $0x8] sm:$0xf]
        %v1263 = vld [vmem:[%s461 + $0xc] sm:$0xf]
        %v1264 = vld [vmem:[%s461 + $0x10] sm:$0xf]
        %v1265 = vld [vmem:[%s461 + $0x14] sm:$0xf]
        %v1266 = vld [vmem:[%s461 + $0x18] sm:$0xf]
        %v1267 = vld [vmem:[%s461 + $0x1c] sm:$0xf]
        %v1268 = vld [vmem:[%s461 + $0x20] sm:$0xf]
        %v1269 = vld [vmem:[%s461 + $0x24] sm:$0xf]
        %v1270 = vld [vmem:[%s461 + $0x28] sm:$0xf]
        %v1271 = vld [vmem:[%s461 + $0x2c] sm:$0xf]
        %v1272 = vld [vmem:[%s461 + $0x30] sm:$0xf]
        %v1273 = vld [vmem:[%s461 + $0x34] sm:$0xf]
        %v1274 = vld [vmem:[%s461 + $0x38] sm:$0xf]
        %v1275 = vld [vmem:[%s461 + $0x3c] sm:$0xf]
        %v1276 = vld [vmem:[%s461 + $0x40] sm:$0xf]
        %v1277 = vld [vmem:[%s461 + $0x44] sm:$0xf]
        %v1278 = vld [vmem:[%s461 + $0x48] sm:$0xf]
        %v1279 = vld [vmem:[%s461 + $0x4c] sm:$0xf]
        %v1280 = vld [vmem:[%s461 + $0x50] sm:$0xf]
        %v1281 = vld [vmem:[%s461 + $0x54] sm:$0xf]
        %v1282 = vld [vmem:[%s461 + $0x58] sm:$0xf]
        %v1283 = vld [vmem:[%s461 + $0x5c] sm:$0xf]
        %v1284 = vld [vmem:[%s461 + $0x60] sm:$0xf]
        %v1285 = vld [vmem:[%s461 + $0x64] sm:$0xf]
        %v1286 = vld [vmem:[%s461 + $0x68] sm:$0xf]
        %v1287 = vld [vmem:[%s461 + $0x6c] sm:$0xf]
        %v1288 = vld [vmem:[%s461 + $0x70] sm:$0xf]
        %v1289 = vld [vmem:[%s461 + $0x74] sm:$0xf]
        %v1290 = vld [vmem:[%s461 + $0x78] sm:$0xf]
        %v1291 = vld [vmem:[%s461 + $0x7c] sm:$0xf]
        %v1324 = vunpack.c.l.b16 %v1260
        %v1325 = vunpack.c.l.b16 %v1261
        %v1326 = vunpack.c.l.b16 %v1262
        %v1327 = vunpack.c.l.b16 %v1263
        %v1328 = vunpack.c.l.b16 %v1264
        %v1329 = vunpack.c.l.b16 %v1265
        %v1330 = vunpack.c.l.b16 %v1266
        %v1331 = vunpack.c.l.b16 %v1267
        %v1332 = vunpack.c.l.b16 %v1268
        %v1333 = vunpack.c.l.b16 %v1269
        %v1334 = vunpack.c.l.b16 %v1270
        %v1335 = vunpack.c.l.b16 %v1271
        %v1336 = vunpack.c.l.b16 %v1272
        %v1337 = vunpack.c.l.b16 %v1273
        %v1338 = vunpack.c.l.b16 %v1274
        %v1339 = vunpack.c.l.b16 %v1275
        %v1340 = vunpack.c.l.b16 %v1276
        %v1341 = vunpack.c.l.b16 %v1277
        %v1342 = vunpack.c.l.b16 %v1278
        %v1343 = vunpack.c.l.b16 %v1279
        %v1344 = vunpack.c.l.b16 %v1280
        %v1345 = vunpack.c.l.b16 %v1281
        %v1346 = vunpack.c.l.b16 %v1282
        %v1347 = vunpack.c.l.b16 %v1283
        %v1348 = vunpack.c.l.b16 %v1284
        %v1349 = vunpack.c.l.b16 %v1285
        %v1350 = vunpack.c.l.b16 %v1286
        %v1351 = vunpack.c.l.b16 %v1287
        %v1352 = vunpack.c.l.b16 %v1288
        %v1353 = vunpack.c.l.b16 %v1289
        %v1354 = vunpack.c.l.b16 %v1290
        %v1355 = vunpack.c.l.b16 %v1291
        %v1356 = vpack.c.b16 %v1325, %v1324
        %v1357 = vpack.c.b16 %v1327, %v1326
        %v1358 = vpack.c.b16 %v1329, %v1328
        %v1359 = vpack.c.b16 %v1331, %v1330
        %v1360 = vpack.c.b16 %v1333, %v1332
        %v1361 = vpack.c.b16 %v1335, %v1334
        %v1362 = vpack.c.b16 %v1337, %v1336
        %v1363 = vpack.c.b16 %v1339, %v1338
        %v1364 = vpack.c.b16 %v1341, %v1340
        %v1365 = vpack.c.b16 %v1343, %v1342
        %v1366 = vpack.c.b16 %v1345, %v1344
        %v1367 = vpack.c.b16 %v1347, %v1346
        %v1368 = vpack.c.b16 %v1349, %v1348
        %v1369 = vpack.c.b16 %v1351, %v1350
        %v1370 = vpack.c.b16 %v1353, %v1352
        %v1371 = vpack.c.b16 %v1355, %v1354
        %1388 = vmatprep.subr.bf16.mxu0 0
        %1389 = vmatpush1.bf16.msra.mxu0 %v1363
        %1390 = vmatprep.subr.bf16.mxu0 0
        %1391 = vmatpush1.bf16.msra.mxu0 %v1362
        %1392 = vmatprep.subr.bf16.mxu0 0
        %1393 = vmatpush1.bf16.msra.mxu0 %v1361
        %1394 = vmatprep.subr.bf16.mxu0 0
        %1395 = vmatpush1.bf16.msra.mxu0 %v1360
        %1396 = vmatprep.subr.bf16.mxu0 0
        %1397 = vmatpush1.bf16.msra.mxu0 %v1359
        %1398 = vmatprep.subr.bf16.mxu0 0
        %1399 = vmatpush1.bf16.msra.mxu0 %v1358
        %1400 = vmatprep.subr.bf16.mxu0 0
        %1401 = vmatpush1.bf16.msra.mxu0 %v1357
        %1402 = vmatprep.subr.bf16.mxu0 0
        %1403 = vmatpush1.bf16.msra.mxu0 %v1356
        %1404 = vmatprep.subr.bf16.mxu0 0
        %1405 = vmatpush2.bf16.msra.mxu0 %v1371
        %1406 = vmatprep.subr.bf16.mxu0 0
        %1407 = vmatpush2.bf16.msra.mxu0 %v1370
        %1408 = vmatprep.subr.bf16.mxu0 0
        %1409 = vmatpush2.bf16.msra.mxu0 %v1369
        %1410 = vmatprep.subr.bf16.mxu0 0
        %1411 = vmatpush2.bf16.msra.mxu0 %v1368
        %1412 = vmatprep.subr.bf16.mxu0 0
        %1413 = vmatpush2.bf16.msra.mxu0 %v1367
        %1414 = vmatprep.subr.bf16.mxu0 0
        %1415 = vmatpush2.bf16.msra.mxu0 %v1366
        %1416 = vmatprep.subr.bf16.mxu0 0
        %1417 = vmatpush2.bf16.msra.mxu0 %v1365
        %1418 = vmatprep.subr.bf16.mxu0 0
        %1419 = vmatpush2.bf16.msra.mxu0 %v1364
        %1420 = vmatprep.mubr.bf16.mxu0 %v1229
        %1421 = vmatmul.mubr.bf16.gmra.mxu0 %v1228
        %v1422 = vpop.f32.mrf.mxu0
        %v1423 = vadd.f32 0.0, %v1422
        %v1424 = vpop.f32.mrf.mxu0
        %v1425 = vpop.f32.mrf.mxu0
        %v1426 = vadd.f32 0.0, %v1425
        %v1427 = vpop.f32.mrf.mxu0
        %1428 = vmatprep.mubr.bf16.mxu0 %v1231
        %1429 = vmatmul.mubr.bf16.gmra.mxu0 %v1230
        %v1430 = vpop.f32.mrf.mxu0
        %v1431 = vadd.f32 0.0, %v1430
        %v1432 = vpop.f32.mrf.mxu0
        %v1433 = vpop.f32.mrf.mxu0
        %v1434 = vadd.f32 0.0, %v1433
        %v1435 = vpop.f32.mrf.mxu0
        %1436 = vmatprep.mubr.bf16.mxu0 %v1233
        %1437 = vmatmul.mubr.bf16.gmra.mxu0 %v1232
        %v1438 = vpop.f32.mrf.mxu0
        %v1439 = vadd.f32 0.0, %v1438
        %v1440 = vpop.f32.mrf.mxu0
        %v1441 = vpop.f32.mrf.mxu0
        %v1442 = vadd.f32 0.0, %v1441
        %v1443 = vpop.f32.mrf.mxu0
        %1444 = vmatprep.mubr.bf16.mxu0 %v1235
        %1445 = vmatmul.mubr.bf16.gmra.mxu0 %v1234
        %v1446 = vpop.f32.mrf.mxu0
        %v1447 = vadd.f32 0.0, %v1446
        %v1448 = vpop.f32.mrf.mxu0
        %v1449 = vpop.f32.mrf.mxu0
        %v1450 = vadd.f32 0.0, %v1449
        %v1451 = vpop.f32.mrf.mxu0
        %1452 = vmatprep.mubr.bf16.mxu0 %v1237
        %1453 = vmatmul.mubr.bf16.gmra.mxu0 %v1236
        %v1454 = vpop.f32.mrf.mxu0
        %v1455 = vadd.f32 0.0, %v1454
        %v1456 = vpop.f32.mrf.mxu0
        %v1457 = vpop.f32.mrf.mxu0
        %v1458 = vadd.f32 0.0, %v1457
        %v1459 = vpop.f32.mrf.mxu0
        %1460 = vmatprep.mubr.bf16.mxu0 %v1239
        %1461 = vmatmul.mubr.bf16.gmra.mxu0 %v1238
        %v1462 = vpop.f32.mrf.mxu0
        %v1463 = vadd.f32 0.0, %v1462
        %v1464 = vpop.f32.mrf.mxu0
        %v1465 = vpop.f32.mrf.mxu0
        %v1466 = vadd.f32 0.0, %v1465
        %v1467 = vpop.f32.mrf.mxu0
        %1468 = vmatprep.mubr.bf16.mxu0 %v1241
        %1469 = vmatmul.mubr.bf16.gmra.mxu0 %v1240
        %v1470 = vpop.f32.mrf.mxu0
        %v1471 = vadd.f32 0.0, %v1470
        %v1472 = vpop.f32.mrf.mxu0
        %v1473 = vpop.f32.mrf.mxu0
        %v1474 = vadd.f32 0.0, %v1473
        %v1475 = vpop.f32.mrf.mxu0
        %1476 = vmatprep.mubr.bf16.mxu0 %v1243
        %1477 = vmatmul.mubr.bf16.gmra.mxu0 %v1242
        %v1478 = vpop.f32.mrf.mxu0
        %v1479 = vadd.f32 0.0, %v1478
        %v1480 = vpop.f32.mrf.mxu0
        %v1481 = vpop.f32.mrf.mxu0
        %v1482 = vadd.f32 0.0, %v1481
        %v1483 = vpop.f32.mrf.mxu0
        %1484 = vdwg.mxu0
        %v1485 = vadd.f32 %v1244, %v1423
        %v1486 = vadd.f32 %v1245, %v1426
        %v1487 = vadd.f32 %v1246, %v1431
        %v1488 = vadd.f32 %v1247, %v1434
        %v1489 = vadd.f32 %v1248, %v1439
        %v1490 = vadd.f32 %v1249, %v1442
        %v1491 = vadd.f32 %v1250, %v1447
        %v1492 = vadd.f32 %v1251, %v1450
        %v1493 = vadd.f32 %v1252, %v1455
        %v1494 = vadd.f32 %v1253, %v1458
        %v1495 = vadd.f32 %v1254, %v1463
        %v1496 = vadd.f32 %v1255, %v1466
        %v1497 = vadd.f32 %v1256, %v1471
        %v1498 = vadd.f32 %v1257, %v1474
        %v1499 = vadd.f32 %v1258, %v1479
        %v1500 = vadd.f32 %v1259, %v1482
        %1501 = vst [vmem:[#allocation2] sm:$0xff] %v1485
        %1502 = vst [vmem:[#allocation2 + $0x8] sm:$0xff] %v1486
        %1503 = vst [vmem:[#allocation2 + $0x10] sm:$0xff] %v1487
        %1504 = vst [vmem:[#allocation2 + $0x18] sm:$0xff] %v1488
        %1505 = vst [vmem:[#allocation2 + $0x20] sm:$0xff] %v1489
        %1506 = vst [vmem:[#allocation2 + $0x28] sm:$0xff] %v1490
        %1507 = vst [vmem:[#allocation2 + $0x30] sm:$0xff] %v1491
        %1508 = vst [vmem:[#allocation2 + $0x38] sm:$0xff] %v1492
        %1509 = vst [vmem:[#allocation2 + $0x40] sm:$0xff] %v1493
        %1510 = vst [vmem:[#allocation2 + $0x48] sm:$0xff] %v1494
        %1511 = vst [vmem:[#allocation2 + $0x50] sm:$0xff] %v1495
        %1512 = vst [vmem:[#allocation2 + $0x58] sm:$0xff] %v1496
        %1513 = vst [vmem:[#allocation2 + $0x60] sm:$0xff] %v1497
        %1514 = vst [vmem:[#allocation2 + $0x68] sm:$0xff] %v1498
        %1515 = vst [vmem:[#allocation2 + $0x70] sm:$0xff] %v1499
        %1516 = vst [vmem:[#allocation2 + $0x78] sm:$0xff] %v1500
        %p1517 = scmp.eq.s32.totalorder %s20, 1
        // Predicated region
        $region117: #{feed_forward.1} parent=103 // pred_check
          %p1518 = pneg %p1517
        $region118: #{feed_forward.1} parent=103 // pred_check_branch
          %1520 = sbr.rel (%p1518) target = $region120
        $region119: #{feed_forward.1} parent=103 // pred_region
          %v1521 = vld [vmem:[#allocation2] sm:$0xff]
          %v1522 = vld [vmem:[#allocation2 + $0x8] sm:$0xff]
          %v1523 = vld [vmem:[#allocation2 + $0x10] sm:$0xff]
          %v1524 = vld [vmem:[#allocation2 + $0x18] sm:$0xff]
          %v1525 = vld [vmem:[#allocation2 + $0x20] sm:$0xff]
          %v1526 = vld [vmem:[#allocation2 + $0x28] sm:$0xff]
          %v1527 = vld [vmem:[#allocation2 + $0x30] sm:$0xff]
          %v1528 = vld [vmem:[#allocation2 + $0x38] sm:$0xff]
          %v1529 = vld [vmem:[#allocation2 + $0x40] sm:$0xff]
          %v1530 = vld [vmem:[#allocation2 + $0x48] sm:$0xff]
          %v1531 = vld [vmem:[#allocation2 + $0x50] sm:$0xff]
          %v1532 = vld [vmem:[#allocation2 + $0x58] sm:$0xff]
          %v1533 = vld [vmem:[#allocation2 + $0x60] sm:$0xff]
          %v1534 = vld [vmem:[#allocation2 + $0x68] sm:$0xff]
          %v1535 = vld [vmem:[#allocation2 + $0x70] sm:$0xff]
          %v1536 = vld [vmem:[#allocation2 + $0x78] sm:$0xff]
          %1537 = vst [vmem:[%s467] sm:$0xff] %v1521
          %1538 = vst [vmem:[%s467 + $0x8] sm:$0xff] %v1522
          %1539 = vst [vmem:[%s467 + $0x10] sm:$0xff] %v1523
          %1540 = vst [vmem:[%s467 + $0x18] sm:$0xff] %v1524
          %1541 = vst [vmem:[%s467 + $0x20] sm:$0xff] %v1525
          %1542 = vst [vmem:[%s467 + $0x28] sm:$0xff] %v1526
          %1543 = vst [vmem:[%s467 + $0x30] sm:$0xff] %v1527
          %1544 = vst [vmem:[%s467 + $0x38] sm:$0xff] %v1528
          %1545 = vst [vmem:[%s467 + $0x40] sm:$0xff] %v1529
          %1546 = vst [vmem:[%s467 + $0x48] sm:$0xff] %v1530
          %1547 = vst [vmem:[%s467 + $0x50] sm:$0xff] %v1531
          %1548 = vst [vmem:[%s467 + $0x58] sm:$0xff] %v1532
          %1549 = vst [vmem:[%s467 + $0x60] sm:$0xff] %v1533
          %1550 = vst [vmem:[%s467 + $0x68] sm:$0xff] %v1534
          %1551 = vst [vmem:[%s467 + $0x70] sm:$0xff] %v1535
          %1552 = vst [vmem:[%s467 + $0x78] sm:$0xff] %v1536
        $region120: #{feed_forward.1} parent=103 // pred_fallthru
          _
        %s1553 = smul.u32 16, %s19
        %p1554 = scmp.lt.s32.totalorder %s1553, 15
        %s1555 = scalar_select %p1554, %s1553, 15
        %s1556 = smul.addr %s1555, 8
        %s1557 = scalar_lea.vmem %s4, %s1556
        // Predicated region
        $region121: #{feed_forward.1} parent=103 // pred_check
          %p1558 = pneg %p149
        $region122: #{feed_forward.1} parent=103 // pred_check_branch
          %1560 = sbr.rel (%p1558) target = $region124
        $region123: #{feed_forward.1} parent=103 // pred_region
          %s1561 = smul.u32 16, %s19
        $region124: #{feed_forward.1} parent=103 // pred_fallthru
          _
        // Predicated region
        $region125: #{feed_forward.1} parent=103 // pred_check
          %p1562 = pneg %p149
        $region126: #{feed_forward.1} parent=103 // pred_check_branch
          %1564 = sbr.rel (%p1562) target = $region128
        $region127: #{feed_forward.1} parent=103 // pred_region
          %s1565 = smul.u32 16, %s19
          %p1566 = scmp.lt.s32.totalorder %s1565, 15
          %s1567 = scalar_select %p1566, %s1565, 15
          %s1568 = smul.addr %s1567, 8
          %s1569 = scalar_lea.vmem %s4, %s1568
        $region128: #{feed_forward.1} parent=103 // pred_fallthru
          _
      $region104: #{feed_forward.1} parent=5 // pred_fallthru
        _
      %p1570 = scmp.le.s32.totalorder 2, %s10
      // Predicated region
      $region129: #{feed_forward.1} parent=5 // pred_check
        %p1571 = pneg %p1570
      $region130: #{feed_forward.1} parent=5 // pred_check_branch
        %1573 = sbr.rel (%p1571) target = $region132
      $region131: #{feed_forward.1} parent=5 // pred_region
        %s1574 = ssub.s32 %s10, 2
      $region132: #{feed_forward.1} parent=5 // pred_fallthru
        _
    $region6: #{feed_forward.1} parent=1 // loop_footer
      %s14 = sadd.s32 1, %s10
    $region7: #{feed_forward.1} parent=1 // loop_footer_branch
      %9 = sbr.rel target = $region3
    $region8: #{feed_forward.1} parent=1 // loop_exit
      _

</llo_original>
